<compile_context>
chip_gen: v7x
topology: tpu7x:2x2x1
jax: 0.10.0
libtpu: 0.0.40
codegen_flags: <defaults>
</compile_context>

<pallas_src>
import functools

import numpy as np

import jax
import jax.numpy as jnp
from jax.experimental import pallas as pl
from jax.experimental.pallas import tpu as pltpu


# ----------------------------------------------------------------------------
# Helpers
# ----------------------------------------------------------------------------
def _round_up(x, m):
    return ((x + m - 1) // m) * m


def _num_tensorcores():
    """Best-effort TensorCores-per-device count (v5e/v6e: 1, v7x: 2)."""
    try:
        info = pltpu.get_tpu_info()
        for attr in ("num_cores", "core_count", "num_tensorcores",
                     "tensorcore_count", "num_cores_per_chip", "cores_per_chip"):
            v = getattr(info, attr, None)
            if isinstance(v, int) and v >= 1:
                return v
    except Exception:
        pass
    try:
        dev = jax.devices()[0]
        for attr in ("num_cores", "core_count"):
            v = getattr(dev, attr, None)
            if isinstance(v, int) and v >= 1:
                return v
    except Exception:
        pass
    return 1


def _plan_tiling(S, B, num_cores, max_tile=32768, force_splits=None):
    """Pick (num_splits, tiles_per_split, tile_pixels, padded_S).

    tile_pixels is a multiple of 128 (lane-dense) and as large as max_tile to
    amortize the ~0.35us per-grid-step overhead.  The pixel axis is split into a
    leading "parallel" axis only when B == 1 and the device has >= 2 TensorCores
    (v7x megacore); on single-TC chips the split would only add overhead.  Tile
    sizes that exactly divide the pixel-block count are preferred so the tail
    padding (an extra HBM pass) is usually avoided.
    """
    s128 = _round_up(S, 128)
    if force_splits is not None:
        num_splits = max(1, int(force_splits))
    else:
        num_splits = 2 if (B == 1 and num_cores >= 2 and s128 >= 2 * 128) else 1
    per_split = _round_up(-(-s128 // num_splits), 128)
    n_blk = per_split // 128
    max_blk = max(1, max_tile // 128)
    if n_blk <= max_blk:
        tile_blk = n_blk
    else:
        tile_blk = max_blk                      # fallback: pad the ragged tail
        for cand in range(max_blk, max_blk // 2, -1):
            if n_blk % cand == 0:               # exact divisor -> no tail padding
                tile_blk = cand
                break
    tile_pixels = tile_blk * 128
    tiles_per_split = -(-per_split // tile_pixels)
    s_pad = num_splits * tiles_per_split * tile_pixels
    return num_splits, tiles_per_split, tile_pixels, s_pad


# ----------------------------------------------------------------------------
# Pallas kernels
# ----------------------------------------------------------------------------
def aff_fusion_kernel(x_ref, w1t_ref, b1_ref, gamma_ref, beta_ref, w2t_ref,
                      b2_ref, logits_ref, hsum_ref, acc_ref):
    """Fused affordance stream for one (batch, pixel-split, pixel-tile) step.

    x_ref:      [1, C_in, TP]  f32 or bf16 pixel tile (channels on sublanes,
                               pixels on lanes; downcast to bf16 in-vreg)
    w1t/b1:     [C_f, C_in] bf16 / [C_f, 1] f32   encoder 1x1 conv (transposed)
    gamma/beta: [1, C_f, 1] f32                   per-batch FiLM language fusion
    w2t/b2:     [1, C_f] bf16 / [1, 1] f32        output 1x1 conv (output_dim=1)
    logits_ref: [1, 1, TP]  f32                   lane-dense per-pixel logits row
    hsum_ref:   [1, 1, C_f, 128] f32              per-(batch,split) dense GAP sums
    acc_ref:    [C_f, 128] f32 VMEM scratch       lane-dense running accumulator
    """
    t = pl.program_id(2)          # pixel-tile index within the split
    n_t = pl.num_programs(2)
    tp = x_ref.shape[2]

    x = x_ref[0].astype(jnp.bfloat16)                                # [C_in, TP]
    # Encoder 1x1 conv on the MXU: bf16 inputs, f32 accumulate.
    h = jnp.dot(w1t_ref[...], x, preferred_element_type=jnp.float32)  # [C_f, TP]
    h = jnp.maximum(h + b1_ref[...], 0.0)                            # bias + ReLU
    h = jnp.maximum(h * gamma_ref[0] + beta_ref[0], 0.0)             # FiLM + ReLU

    # Output 1x1 conv (M=1): keep on the MXU but stream h as bf16, which halves
    # the second matmul's push traffic.  Lane-dense [1, TP] row store.
    logits_ref[0] = (jnp.dot(w2t_ref[...], h.astype(jnp.bfloat16),
                             preferred_element_type=jnp.float32) + b2_ref[...])

    # GAP numerator on the VPU: fold the TP lanes into 128-lane partial sums
    # (no MXU ones-dot, no cross-lane reduce inside the kernel).  No tail mask
    # is needed: zero-padded tail pixels contribute the per-batch constant
    # h_pad, which the wrapper subtracts/adds analytically.
    part = h[:, 0:128]
    for i in range(1, tp // 128):
        part = part + h[:, i * 128:(i + 1) * 128]

    @pl.when(t == 0)
    def _():
        acc_ref[...] = part

    @pl.when(t > 0)
    def _():
        acc_ref[...] = acc_ref[...] + part

    @pl.when(t == n_t - 1)
    def _():
        hsum_ref[0, 0] = acc_ref[...]        # dense [C_f, 128] flush, no relayout


def masked_softmax_kernel(x_ref, o_ref, *, valid_s):
    """Spatial softmax over the valid pixels of one batch element.

    x_ref/o_ref: [1, 1, S_pad] lane-dense logits / probabilities.  Tail entries
    beyond valid_s (pixel-axis padding) are excluded; the mask is emitted only
    when padding actually exists (static check).
    """
    x = x_ref[0]                                       # [1, S_pad]
    s_pad = x.shape[-1]
    if valid_s < s_pad:
        col = jax.lax.broadcasted_iota(jnp.int32, x.shape, 1)
        valid = col < valid_s
        m = jnp.max(jnp.where(valid, x, jnp.finfo(jnp.float32).min))
        e = jnp.where(valid, jnp.exp(x - m), 0.0)
    else:
        m = jnp.max(x)
        e = jnp.exp(x - m)
    o_ref[0] = e / jnp.sum(e)


# ----------------------------------------------------------------------------
# Pallas wrappers
# ----------------------------------------------------------------------------
def aff_stream_pallas(x_csp, w1t, b1, gamma, beta, w2t, b2, *,
                      num_splits, tiles_per_split, tile_pixels):
    """x_csp: [B, C_in, S_pad] (f32 or bf16).  Returns
    (logits [B,1,S_pad] f32, hsum [B,num_splits,C_f,128] f32)."""
    B, C_in, S_pad = x_csp.shape
    C_f = w1t.shape[0]
    grid = (B, num_splits, tiles_per_split)

    logits, hsum = pl.pallas_call(
        aff_fusion_kernel,
        out_shape=(jax.ShapeDtypeStruct((B, 1, S_pad), jnp.float32),
                   jax.ShapeDtypeStruct((B, num_splits, C_f, 128), jnp.float32)),
        grid_spec=pltpu.PrefetchScalarGridSpec(
            num_scalar_prefetch=0,
            grid=grid,
            in_specs=[
                pl.BlockSpec((1, C_in, tile_pixels),
                             lambda b, p, t: (b, 0, p * tiles_per_split + t)),
                pl.BlockSpec((C_f, C_in), lambda b, p, t: (0, 0)),
                pl.BlockSpec((C_f, 1), lambda b, p, t: (0, 0)),
                pl.BlockSpec((1, C_f, 1), lambda b, p, t: (b, 0, 0)),
                pl.BlockSpec((1, C_f, 1), lambda b, p, t: (b, 0, 0)),
                pl.BlockSpec((1, C_f), lambda b, p, t: (0, 0)),
                pl.BlockSpec((1, 1), lambda b, p, t: (0, 0)),
            ],
            out_specs=(
                pl.BlockSpec((1, 1, tile_pixels),
                             lambda b, p, t: (b, 0, p * tiles_per_split + t)),
                pl.BlockSpec((1, 1, C_f, 128), lambda b, p, t: (b, p, 0, 0)),
            ),
            scratch_shapes=[pltpu.VMEM((C_f, 128), jnp.float32)],
        ),
        compiler_params=pltpu.CompilerParams(
            # batch + pixel-split axes shard across TensorCores; the pixel-tile
            # axis carries the resident GAP accumulator so it must be arbitrary.
            dimension_semantics=("parallel", "parallel", "arbitrary"),
            # Even at TP=32768 the per-step footprint (x tile + logits + the
            # ~4 MiB f32 h intermediate + bf16 copy) stays well under 32 MiB.
            vmem_limit_bytes=32 * 1024 * 1024),
    )(x_csp, w1t, b1, gamma, beta, w2t, b2)
    return logits, hsum


def softmax_pallas(logits_flat, valid_s):
    """logits_flat: [B, 1, S_pad] f32 -> probabilities [B, 1, S_pad] f32."""
    B, _, S_pad = logits_flat.shape
    kernel = functools.partial(masked_softmax_kernel, valid_s=int(valid_s))
    # TODO(synk): for very large planes (> ~4M px per batch element) this
    # per-batch whole-row block should become a tiled two-pass (online) softmax
    # so it fits v7x's 64 MiB physical VMEM and both of its TensorCores get work.
    return pl.pallas_call(
        kernel,
        out_shape=jax.ShapeDtypeStruct((B, 1, S_pad), jnp.float32),
        grid_spec=pltpu.PrefetchScalarGridSpec(
            num_scalar_prefetch=0,
            grid=(B,),
            in_specs=[pl.BlockSpec((1, 1, S_pad), lambda b: (b, 0, 0))],
            out_specs=pl.BlockSpec((1, 1, S_pad), lambda b: (b, 0, 0)),
        ),
        compiler_params=pltpu.CompilerParams(
            dimension_semantics=("parallel",),
            vmem_limit_bytes=32 * 1024 * 1024),
    )(logits_flat)


# ----------------------------------------------------------------------------
# Module
# ----------------------------------------------------------------------------
class AffDepthLangFusionPixelPallas:
    """JAX/Pallas re-implementation of AffDepthLangFusionPixel.forward()."""

    def __init__(self, in_shape, *, key, c_feat=32, lang_dim=32, emb_dim=16,
                 vocab=100, output_dim=1, force_splits=None):
        # TODO(synk): output_dim > 1 would need a [output_dim, C_f] output conv
        # and per-channel handling (the reference flattens channels too).
        assert output_dim == 1
        H, W, C = in_shape
        max_dim = max(H, W)
        pad_h = (max_dim - H) // 2
        pad_w = (max_dim - W) // 2
        # Same order as the PyTorch module's F.pad tuple: (wL, wR, hL, hR, cL, cR)
        self.padding = (pad_w, pad_w, pad_h, pad_h, 0, 0)
        self.in_shape = (H + 2 * pad_h, W + 2 * pad_w, C)   # padded square shape
        self.output_dim = output_dim
        self.c_feat = c_feat
        self.lang_dim = lang_dim
        self._num_cores = _num_tensorcores()
        self._force_splits = force_splits

        ks = jax.random.split(key, 10)
        s = 0.1
        # synthetic language encoder (stand-in for the frozen CLIP text encoder)
        self.emb_table = s * jax.random.normal(ks[0], (vocab, emb_dim), jnp.float32)
        self.w_txt = s * jax.random.normal(ks[1], (emb_dim, lang_dim), jnp.float32)
        self.b_txt = jnp.zeros((lang_dim,), jnp.float32)
        # affordance stream: encoder 1x1 conv (stored transposed, kernel layout),
        # FiLM projections, output 1x1 conv (stored as a row).
        self.w1t = s * jax.random.normal(ks[2], (c_feat, C), jnp.float32)
        self.w1t_bf16 = self.w1t.astype(jnp.bfloat16)
        self.b1 = 0.01 * jnp.ones((c_feat, 1), jnp.float32)
        self.w_gamma = s * jax.random.normal(ks[3], (lang_dim, c_feat), jnp.float32)
        self.b_gamma = jnp.ones((c_feat,), jnp.float32)
        self.w_beta = s * jax.random.normal(ks[4], (lang_dim, c_feat), jnp.float32)
        self.b_beta = jnp.zeros((c_feat,), jnp.float32)
        self.w2t = s * jax.random.normal(ks[5], (1, c_feat), jnp.float32)
        self.w2t_bf16 = self.w2t.astype(jnp.bfloat16)
        self.b2 = jnp.zeros((1, 1), jnp.float32)
        # depth stream head (distribution: mu, sigma)
        self.w_depth = s * jax.random.normal(ks[6], (c_feat + lang_dim, 2), jnp.float32)
        self.b_depth = jnp.zeros((2,), jnp.float32)

    def encode_text(self, lang_tokens):
        # TODO(synk): real module tokenizes raw strings through a frozen CLIP text
        # encoder; here tokens are pre-tokenized ids through a synthetic encoder.
        emb = self.emb_table[lang_tokens]                    # [B, L, E]
        pooled = jnp.mean(emb, axis=1)                       # [B, E]
        return jnp.tanh(pooled @ self.w_txt + self.b_txt)    # [B, lang_dim]

    @functools.partial(jax.jit, static_argnums=(0, 3))
    def forward(self, inp_img, lang_tokens, softmax=True):
        """inp_img: [B, C, H, W] (NCHW, matching the PyTorch API)."""
        B, C, H, W = inp_img.shape
        S_hw = H * W
        Hp = H + self.padding[2] + self.padding[3]
        Wp = W + self.padding[0] + self.padding[1]
        S_square = Hp * Wp      # GAP denominator of the padded-square reference

        num_splits, tiles_per_split, tile_pixels, s_pad = _plan_tiling(
            S_hw, B, self._num_cores, force_splits=self._force_splits)

        # Hot-path input: native NCHW pixels, spatial dims flattened, NO
        # pad-to-square materialization.  Border pixels are x == 0, so their
        # feature vector is a per-batch constant handled analytically below.
        x_csp = inp_img.reshape(B, C, S_hw)
        if s_pad > S_hw:
            # Tail padding needed: fuse the bf16 downcast into the same pad pass.
            x_csp = jnp.pad(x_csp.astype(jnp.bfloat16),
                            ((0, 0), (0, 0), (0, s_pad - S_hw)))
        # else: feed f32 directly; the kernel downcasts per tile (avoids an
        # extra full-image cast pass through HBM).

        # Language encoding + FiLM parameters (glue-sized matmuls, plain XLA).
        text_enc = self.encode_text(lang_tokens)                          # [B, D]
        gamma2d = text_enc @ self.w_gamma + self.b_gamma                  # [B, Cf]
        beta2d = text_enc @ self.w_beta + self.b_beta                     # [B, Cf]
        gamma = gamma2d[:, :, None]
        beta = beta2d[:, :, None]

        # Hot path: fused affordance stream (Pallas).
        logits_flat, hsum = aff_stream_pallas(
            x_csp, self.w1t_bf16, self.b1, gamma, beta, self.w2t_bf16, self.b2,
            num_splits=num_splits, tiles_per_split=tiles_per_split,
            tile_pixels=tile_pixels)

        # Hidden (GAP) feature over the padded square of the reference model.
        # Zero-input pixels (square-pad border OR kernel tail padding) all map
        # to the same per-batch constant h_pad, so their contribution is added
        # (or removed) analytically instead of being computed or masked.
        h_pad = jnp.maximum(
            gamma2d * jnp.maximum(self.b1[:, 0], 0.0)[None, :] + beta2d, 0.0)
        hsum_total = jnp.sum(hsum, axis=(1, 3))                           # [B, Cf]
        hidden = (hsum_total + float(S_square - s_pad) * h_pad) / float(S_square)

        depth_in = jnp.concatenate([hidden, text_enc], axis=-1)
        dd = depth_in @ self.w_depth + self.b_depth                       # [B, 2]
        depth_dist = (dd[:, 0:1], jax.nn.softplus(dd[:, 1:2]))            # (mu, sigma)

        # NOTE: logits in the s_pad > S_hw tail hold the constant w2.h_pad + b2;
        # they are never consumed (sliced off / masked in the softmax kernel).
        if softmax:
            probs = softmax_pallas(logits_flat, S_hw)                     # [B,1,s_pad]
            aff_out = probs[:, 0, :S_hw].reshape(B, H, W)[..., None]      # [B,H,W,1]
        else:
            aff_out = logits_flat[:, 0, :S_hw]                            # [B, H*W]

        output = {"aff": aff_out, "depth_dist": depth_dist}
        info = {"hidden_layers": [hidden], "text_enc": text_enc}
        return output, info


# ----------------------------------------------------------------------------
# Pure-JAX reference (mirrors the PyTorch dataflow: pad-to-square, per-pixel
# stream, GAP over the padded square, crop, spatial softmax).
# ----------------------------------------------------------------------------
def reference_forward(model, inp_img, lang_tokens):
    B, C, H, W = inp_img.shape
    wl, wr, hl, hr, _, _ = model.padding
    x = jnp.pad(inp_img, ((0, 0), (0, 0), (hl, hr), (wl, wr)))
    Hp, Wp = x.shape[2], x.shape[3]
    xf = x.reshape(B, C, Hp * Wp).astype(jnp.bfloat16)

    text_enc = model.encode_text(lang_tokens)
    gamma = text_enc @ model.w_gamma + model.b_gamma
    beta = text_enc @ model.w_beta + model.b_beta

    h = jnp.einsum("fc,bcs->bfs", model.w1t_bf16, xf,
                   preferred_element_type=jnp.float32)
    h = jnp.maximum(h + model.b1[None], 0.0)
    h = jnp.maximum(h * gamma[:, :, None] + beta[:, :, None], 0.0)
    logit = jnp.einsum("of,bfs->bos", model.w2t_bf16, h.astype(jnp.bfloat16),
                       preferred_element_type=jnp.float32) + model.b2[None]
    logit_img = logit.reshape(B, Hp, Wp)
    crop = logit_img[:, hl:hl + H, wl:wl + W]

    hidden = jnp.mean(h, axis=2)                                      # [B, Cf]
    depth_in = jnp.concatenate([hidden, text_enc], axis=-1)
    dd = depth_in @ model.w_depth + model.b_depth
    mu, sigma = dd[:, 0:1], jax.nn.softplus(dd[:, 1:2])

    probs = jax.nn.softmax(crop.reshape(B, -1), axis=-1).reshape(B, H, W, 1)
    return probs, (mu, sigma), hidden


# ----------------------------------------------------------------------------
# Main
# ----------------------------------------------------------------------------
if __name__ == "__main__":
    # ----- Test 1: B=2, non-square (exercises pad-to-square semantics handled
    # analytically + bf16 tail-pad feed path), plus pure-JAX reference check.
    B, C, H, W = 2, 4, 16, 12
    L = 8
    key = jax.random.PRNGKey(0)
    k_img, k_tok, k_par = jax.random.split(key, 3)

    inp_img = jax.random.normal(k_img, (B, C, H, W), jnp.float32)        # NCHW
    lang_tokens = jax.random.randint(k_tok, (B, L), 0, 100)

    model = AffDepthLangFusionPixelPallas((H, W, C), key=k_par)
    output, info = model.forward(inp_img, lang_tokens, True)

    aff = jax.block_until_ready(output["aff"])
    mu, sigma = output["depth_dist"]
    jax.block_until_ready(mu)

    assert aff.shape == (B, H, W, 1)
    assert mu.shape == (B, 1) and sigma.shape == (B, 1)
    assert bool(jnp.all(jnp.isfinite(aff)))
    sums = jnp.sum(aff.reshape(B, -1), axis=-1)
    assert bool(jnp.all(jnp.abs(sums - 1.0) < 1e-3)), sums

    ref_aff, (ref_mu, ref_sigma), ref_hidden = reference_forward(
        model, inp_img, lang_tokens)
    np.testing.assert_allclose(np.asarray(aff), np.asarray(ref_aff),
                               rtol=1e-2, atol=1e-5)
    np.testing.assert_allclose(np.asarray(mu), np.asarray(ref_mu),
                               rtol=1e-2, atol=1e-4)
    np.testing.assert_allclose(np.asarray(sigma), np.asarray(ref_sigma),
                               rtol=1e-2, atol=1e-4)
    np.testing.assert_allclose(np.asarray(info["hidden_layers"][0]),
                               np.asarray(ref_hidden), rtol=1e-2, atol=1e-5)

    # non-softmax path (flattened cropped logits, matching the reference module)
    out_ns, _ = model.forward(inp_img, lang_tokens, False)
    flat_logits = jax.block_until_ready(out_ns["aff"])
    assert flat_logits.shape == (B, H * W)
    assert bool(jnp.all(jnp.isfinite(flat_logits)))

    # ----- Test 2: B=1, square 16x16 (H*W multiple of 128 -> exercises the
    # direct-f32, zero-tail-padding feed path and whatever split count the
    # hardware reports).
    B2, H2, W2 = 1, 16, 16
    inp2 = jax.random.normal(jax.random.PRNGKey(1), (B2, C, H2, W2), jnp.float32)
    tok2 = jax.random.randint(jax.random.PRNGKey(2), (B2, L), 0, 100)
    model2 = AffDepthLangFusionPixelPallas((H2, W2, C), key=k_par)
    out2, _ = model2.forward(inp2, tok2, True)
    aff2 = jax.block_until_ready(out2["aff"])
    assert aff2.shape == (B2, H2, W2, 1)
    assert bool(jnp.all(jnp.isfinite(aff2)))
    s2 = jnp.sum(aff2.reshape(B2, -1), axis=-1)
    assert bool(jnp.all(jnp.abs(s2 - 1.0) < 1e-3)), s2

    # ----- Test 3: B=1, 12x12 with a forced pixel-axis split (exercises the
    # v7x megacore path + ragged kernel-tail handling on any hardware).
    B3, H3, W3 = 1, 12, 12
    inp3 = jax.random.normal(jax.random.PRNGKey(3), (B3, C, H3, W3), jnp.float32)
    tok3 = jax.random.randint(jax.random.PRNGKey(4), (B3, L), 0, 100)
    model3 = AffDepthLangFusionPixelPallas((H3, W3, C), key=k_par, force_splits=2)
    out3, info3 = model3.forward(inp3, tok3, True)
    aff3 = jax.block_until_ready(out3["aff"])
    assert aff3.shape == (B3, H3, W3, 1)
    assert bool(jnp.all(jnp.isfinite(aff3)))
    s3 = jnp.sum(aff3.reshape(B3, -1), axis=-1)
    assert bool(jnp.all(jnp.abs(s3 - 1.0) < 1e-3)), s3
    ref3_aff, (ref3_mu, _), ref3_hidden = reference_forward(model3, inp3, tok3)
    np.testing.assert_allclose(np.asarray(aff3), np.asarray(ref3_aff),
                               rtol=1e-2, atol=1e-5)
    np.testing.assert_allclose(np.asarray(info3["hidden_layers"][0]),
                               np.asarray(ref3_hidden), rtol=1e-2, atol=1e-5)

    print("KERNEL_OK")
</pallas_src>

<mosaic_0001>
module attributes {stable_mosaic.version = 11 : i64} {
  func.func @masked_softmax_kernel(%arg0: i32, %arg1: memref<1x1x256xf32, #tpu.memory_space<vmem>>, %arg2: memref<1x1x256xf32, #tpu.memory_space<vmem>>) attributes {dimension_semantics = [#tpu.dimension_semantics<parallel>], iteration_bounds = array<i64: 2>, scalar_prefetch = 0 : i64, scratch_operands = 0 : i64, tpu.core_type = #tpu.core_type<tc>, window_params = [{transform_indices = @transform_0, window_bounds = array<i64: 1, 1, 256>}, {transform_indices = @transform_1, window_bounds = array<i64: 1, 1, 256>}]} {
    %c0 = arith.constant 0 : index
    %c0_0 = arith.constant 0 : index
    %c0_1 = arith.constant 0 : index
    %0 = vector.load %arg1[%c0, %c0_0, %c0_1] : memref<1x1x256xf32, #tpu.memory_space<vmem>>, vector<1x1x256xf32>
    %1 = vector.shape_cast %0 : vector<1x1x256xf32> to vector<1x256xf32>
    %2 = tpu.iota {dimensions = array<i32: 1>} : vector<1x256xi32>
    %c192_i32 = arith.constant 192 : i32
    %3 = vector.broadcast %c192_i32 : i32 to vector<1x256xi32>
    %4 = arith.cmpi slt, %2, %3 : vector<1x256xi32>
    %cst = arith.constant -3.40282347E+38 : f32
    %5 = vector.broadcast %cst : f32 to vector<1x256xf32>
    %6 = arith.select %4, %1, %5 : vector<1x256xi1>, vector<1x256xf32>
    %7 = vector.shape_cast %6 : vector<1x256xf32> to vector<1x1x256xf32>
    %cst_2 = arith.constant dense<0xFF800000> : vector<1xf32>
    %8 = vector.multi_reduction <maximumf>, %7, %cst_2 [1, 2] : vector<1x1x256xf32> to vector<1xf32>
    %9 = vector.shape_cast %8 : vector<1xf32> to vector<1x1x1xf32>
    %10 = vector.extract %9[0, 0, 0] : f32 from vector<1x1x1xf32>
    %11 = vector.broadcast %10 : f32 to vector<1x256xf32>
    %12 = arith.subf %1, %11 : vector<1x256xf32>
    %13 = math.exp %12 : vector<1x256xf32>
    %cst_3 = arith.constant 0.000000e+00 : f32
    %14 = vector.broadcast %cst_3 : f32 to vector<1x256xf32>
    %15 = arith.select %4, %13, %14 : vector<1x256xi1>, vector<1x256xf32>
    %16 = vector.shape_cast %15 : vector<1x256xf32> to vector<1x1x256xf32>
    %cst_4 = arith.constant dense<0.000000e+00> : vector<1xf32>
    %17 = vector.multi_reduction <add>, %16, %cst_4 [1, 2] : vector<1x1x256xf32> to vector<1xf32>
    %18 = vector.shape_cast %17 : vector<1xf32> to vector<1x1x1xf32>
    %19 = vector.extract %18[0, 0, 0] : f32 from vector<1x1x1xf32>
    %20 = vector.broadcast %19 : f32 to vector<1x256xf32>
    %21 = arith.divf %15, %20 : vector<1x256xf32>
    %c0_5 = arith.constant 0 : index
    %c0_6 = arith.constant 0 : index
    %c0_7 = arith.constant 0 : index
    %22 = vector.load %arg2[%c0_5, %c0_6, %c0_7] : memref<1x1x256xf32, #tpu.memory_space<vmem>>, vector<1x1x256xf32>
    %23 = vector.shape_cast %22 : vector<1x1x256xf32> to vector<1x256xf32>
    %24 = vector.shape_cast %21 : vector<1x256xf32> to vector<1x1x256xf32>
    tpu.vector_store %arg2[%c0_5, %c0_6, %c0_7], %24 {strides = array<i32>} : memref<1x1x256xf32, #tpu.memory_space<vmem>>, vector<1x1x256xf32>,
    return
  }
  func.func @transform_0(%arg0: i32) -> (i32, i32, i32) {
    %c0_i32 = arith.constant 0 : i32
    %c0_i32_0 = arith.constant 0 : i32
    %c0_i32_1 = arith.constant 0 : i32
    return %arg0, %c0_i32, %c0_i32_0 : i32, i32, i32
  }
  func.func @transform_1(%arg0: i32) -> (i32, i32, i32) {
    %c0_i32 = arith.constant 0 : i32
    %c0_i32_0 = arith.constant 0 : i32
    %c0_i32_1 = arith.constant 0 : i32
    return %arg0, %c0_i32, %c0_i32_0 : i32, i32, i32
  }
}

module attributes {stable_mosaic.version = 11 : i64} {
  func.func @aff_fusion_kernel(%arg0: i32, %arg1: i32, %arg2: i32, %arg3: memref<1x4x256xbf16, #tpu.memory_space<vmem>>, %arg4: memref<32x4xbf16, #tpu.memory_space<vmem>>, %arg5: memref<32x1xf32, #tpu.memory_space<vmem>>, %arg6: memref<1x32x1xf32, #tpu.memory_space<vmem>>, %arg7: memref<1x32x1xf32, #tpu.memory_space<vmem>>, %arg8: memref<1x32xbf16, #tpu.memory_space<vmem>>, %arg9: memref<1x1xf32, #tpu.memory_space<vmem>>, %arg10: memref<1x1x256xf32, #tpu.memory_space<vmem>>, %arg11: memref<1x1x32x128xf32, #tpu.memory_space<vmem>>, %arg12: memref<32x128xf32, #tpu.memory_space<vmem>>) attributes {dimension_semantics = [#tpu.dimension_semantics<parallel>, #tpu.dimension_semantics<parallel>, #tpu.dimension_semantics<arbitrary>], iteration_bounds = array<i64: 2, 1, 1>, scalar_prefetch = 0 : i64, scratch_operands = 1 : i64, tpu.core_type = #tpu.core_type<tc>, window_params = [{transform_indices = @transform_0, window_bounds = array<i64: 1, 4, 256>}, {pipeline_mode = #tpu.pipeline_mode<synchronous>, transform_indices = @transform_1, window_bounds = array<i64: 32, 4>}, {pipeline_mode = #tpu.pipeline_mode<synchronous>, transform_indices = @transform_2, window_bounds = array<i64: 32, 1>}, {transform_indices = @transform_3, window_bounds = array<i64: 1, 32, 1>}, {transform_indices = @transform_4, window_bounds = array<i64: 1, 32, 1>}, {pipeline_mode = #tpu.pipeline_mode<synchronous>, transform_indices = @transform_5, window_bounds = array<i64: 1, 32>}, {pipeline_mode = #tpu.pipeline_mode<synchronous>, transform_indices = @transform_6, window_bounds = array<i64: 1, 1>}, {transform_indices = @transform_7, window_bounds = array<i64: 1, 1, 256>}, {transform_indices = @transform_8, window_bounds = array<i64: 1, 1, 32, 128>}]} {
    %c0 = arith.constant 0 : index
    %c0_0 = arith.constant 0 : index
    %c0_1 = arith.constant 0 : index
    %0 = vector.load %arg3[%c0, %c0_0, %c0_1] : memref<1x4x256xbf16, #tpu.memory_space<vmem>>, vector<1x4x256xbf16>
    %1 = vector.shape_cast %0 : vector<1x4x256xbf16> to vector<4x256xbf16>
    %c0_2 = arith.constant 0 : index
    %c0_3 = arith.constant 0 : index
    %2 = vector.load %arg4[%c0_2, %c0_3] : memref<32x4xbf16, #tpu.memory_space<vmem>>, vector<32x4xbf16>
    %cst = arith.constant dense<0.000000e+00> : vector<32x256xf32>
    %3 = tpu.matmul %2, %1, %cst {dimension_numbers = #tpu.dot_dimension_numbers<[1], [0], [0], [1], [0, 0, 1, 1], [], []>} : vector<32x4xbf16>, vector<4x256xbf16>, vector<32x256xf32> -> vector<32x256xf32>
    %c0_4 = arith.constant 0 : index
    %c0_5 = arith.constant 0 : index
    %4 = vector.load %arg5[%c0_4, %c0_5] : memref<32x1xf32, #tpu.memory_space<vmem>>, vector<32x1xf32>
    %5 = vector.broadcast %4 : vector<32x1xf32> to vector<32x256xf32>
    %6 = arith.addf %3, %5 : vector<32x256xf32>
    %cst_6 = arith.constant 0.000000e+00 : f32
    %7 = vector.broadcast %cst_6 : f32 to vector<32x256xf32>
    %8 = arith.maximumf %6, %7 : vector<32x256xf32>
    %c0_7 = arith.constant 0 : index
    %c0_8 = arith.constant 0 : index
    %c0_9 = arith.constant 0 : index
    %9 = vector.load %arg6[%c0_7, %c0_8, %c0_9] : memref<1x32x1xf32, #tpu.memory_space<vmem>>, vector<1x32x1xf32>
    %10 = vector.shape_cast %9 : vector<1x32x1xf32> to vector<32x1xf32>
    %11 = vector.broadcast %10 : vector<32x1xf32> to vector<32x256xf32>
    %12 = arith.mulf %8, %11 : vector<32x256xf32>
    %c0_10 = arith.constant 0 : index
    %c0_11 = arith.constant 0 : index
    %c0_12 = arith.constant 0 : index
    %13 = vector.load %arg7[%c0_10, %c0_11, %c0_12] : memref<1x32x1xf32, #tpu.memory_space<vmem>>, vector<1x32x1xf32>
    %14 = vector.shape_cast %13 : vector<1x32x1xf32> to vector<32x1xf32>
    %15 = vector.broadcast %14 : vector<32x1xf32> to vector<32x256xf32>
    %16 = arith.addf %12, %15 : vector<32x256xf32>
    %cst_13 = arith.constant 0.000000e+00 : f32
    %17 = vector.broadcast %cst_13 : f32 to vector<32x256xf32>
    %18 = arith.maximumf %16, %17 : vector<32x256xf32>
    %c0_14 = arith.constant 0 : index
    %c0_15 = arith.constant 0 : index
    %19 = vector.load %arg8[%c0_14, %c0_15] : memref<1x32xbf16, #tpu.memory_space<vmem>>, vector<1x32xbf16>
    %20 = arith.truncf %18 : vector<32x256xf32> to vector<32x256xbf16>
    %cst_16 = arith.constant dense<0.000000e+00> : vector<1x256xf32>
    %21 = tpu.matmul %19, %20, %cst_16 {dimension_numbers = #tpu.dot_dimension_numbers<[1], [0], [0], [1], [0, 0, 1, 1], [], []>} : vector<1x32xbf16>, vector<32x256xbf16>, vector<1x256xf32> -> vector<1x256xf32>
    %c0_17 = arith.constant 0 : index
    %c0_18 = arith.constant 0 : index
    %22 = vector.load %arg9[%c0_17, %c0_18] : memref<1x1xf32, #tpu.memory_space<vmem>>, vector<1x1xf32>
    %23 = vector.broadcast %22 : vector<1x1xf32> to vector<1x256xf32>
    %24 = arith.addf %21, %23 : vector<1x256xf32>
    %c0_19 = arith.constant 0 : index
    %c0_20 = arith.constant 0 : index
    %c0_21 = arith.constant 0 : index
    %25 = vector.load %arg10[%c0_19, %c0_20, %c0_21] : memref<1x1x256xf32, #tpu.memory_space<vmem>>, vector<1x1x256xf32>
    %26 = vector.shape_cast %25 : vector<1x1x256xf32> to vector<1x256xf32>
    %27 = vector.shape_cast %24 : vector<1x256xf32> to vector<1x1x256xf32>
    tpu.vector_store %arg10[%c0_19, %c0_20, %c0_21], %27 {strides = array<i32>} : memref<1x1x256xf32, #tpu.memory_space<vmem>>, vector<1x1x256xf32>,
    %28 = vector.extract_strided_slice %18 {offsets = [0, 0], sizes = [32, 128], strides = [1, 1]} : vector<32x256xf32> to vector<32x128xf32>
    %29 = vector.extract_strided_slice %18 {offsets = [0, 128], sizes = [32, 128], strides = [1, 1]} : vector<32x256xf32> to vector<32x128xf32>
    %30 = arith.addf %28, %29 : vector<32x128xf32>
    %c0_i32 = arith.constant 0 : i32
    %31 = arith.cmpi eq, %arg2, %c0_i32 : i32
    %32 = arith.extui %31 : i1 to i32
    %c0_i32_22 = arith.constant 0 : i32
    %33 = arith.cmpi ne, %32, %c0_i32_22 : i32
    scf.if %33 {
      %c0_27 = arith.constant 0 : index
      %c0_28 = arith.constant 0 : index
      %40 = vector.load %arg12[%c0_27, %c0_28] : memref<32x128xf32, #tpu.memory_space<vmem>>, vector<32x128xf32>
      tpu.vector_store %arg12[%c0_27, %c0_28], %30 {strides = array<i32>} : memref<32x128xf32, #tpu.memory_space<vmem>>, vector<32x128xf32>,
    } else {
    }
    %c0_i32_23 = arith.constant 0 : i32
    %34 = arith.cmpi sgt, %arg2, %c0_i32_23 : i32
    %35 = arith.extui %34 : i1 to i32
    %c0_i32_24 = arith.constant 0 : i32
    %36 = arith.cmpi ne, %35, %c0_i32_24 : i32
    scf.if %36 {
      %c0_27 = arith.constant 0 : index
      %c0_28 = arith.constant 0 : index
      %40 = vector.load %arg12[%c0_27, %c0_28] : memref<32x128xf32, #tpu.memory_space<vmem>>, vector<32x128xf32>
      %41 = arith.addf %40, %30 : vector<32x128xf32>
      %c0_29 = arith.constant 0 : index
      %c0_30 = arith.constant 0 : index
      %42 = vector.load %arg12[%c0_29, %c0_30] : memref<32x128xf32, #tpu.memory_space<vmem>>, vector<32x128xf32>
      tpu.vector_store %arg12[%c0_29, %c0_30], %41 {strides = array<i32>} : memref<32x128xf32, #tpu.memory_space<vmem>>, vector<32x128xf32>,
    } else {
    }
    %c0_i32_25 = arith.constant 0 : i32
    %37 = arith.cmpi eq, %arg2, %c0_i32_25 : i32
    %38 = arith.extui %37 : i1 to i32
    %c0_i32_26 = arith.constant 0 : i32
    %39 = arith.cmpi ne, %38, %c0_i32_26 : i32
    scf.if %39 {
      %c0_27 = arith.constant 0 : index
      %c0_28 = arith.constant 0 : index
      %40 = vector.load %arg12[%c0_27, %c0_28] : memref<32x128xf32, #tpu.memory_space<vmem>>, vector<32x128xf32>
      %c0_29 = arith.constant 0 : index
      %c0_30 = arith.constant 0 : index
      %c0_31 = arith.constant 0 : index
      %c0_32 = arith.constant 0 : index
      %41 = vector.load %arg11[%c0_29, %c0_30, %c0_31, %c0_32] : memref<1x1x32x128xf32, #tpu.memory_space<vmem>>, vector<1x1x32x128xf32>
      %42 = vector.shape_cast %41 : vector<1x1x32x128xf32> to vector<32x128xf32>
      %43 = vector.shape_cast %40 : vector<32x128xf32> to vector<1x1x32x128xf32>
      tpu.vector_store %arg11[%c0_29, %c0_30, %c0_31, %c0_32], %43 {strides = array<i32>} : memref<1x1x32x128xf32, #tpu.memory_space<vmem>>, vector<1x1x32x128xf32>,
    } else {
    }
    return
  }
  func.func @transform_0(%arg0: i32, %arg1: i32, %arg2: i32) -> (i32, i32, i32) {
    %c1_i32 = arith.constant 1 : i32
    %0 = arith.muli %arg1, %c1_i32 : i32
    %1 = arith.addi %0, %arg2 : i32
    %c0_i32 = arith.constant 0 : i32
    %c0_i32_0 = arith.constant 0 : i32
    return %arg0, %c0_i32, %1 : i32, i32, i32
  }
  func.func @transform_1(%arg0: i32, %arg1: i32, %arg2: i32) -> (i32, i32) {
    %c0_i32 = arith.constant 0 : i32
    %c0_i32_0 = arith.constant 0 : i32
    %c0_i32_1 = arith.constant 0 : i32
    return %c0_i32, %c0_i32_0 : i32, i32
  }
  func.func @transform_2(%arg0: i32, %arg1: i32, %arg2: i32) -> (i32, i32) {
    %c0_i32 = arith.constant 0 : i32
    %c0_i32_0 = arith.constant 0 : i32
    %c0_i32_1 = arith.constant 0 : i32
    return %c0_i32, %c0_i32_0 : i32, i32
  }
  func.func @transform_3(%arg0: i32, %arg1: i32, %arg2: i32) -> (i32, i32, i32) {
    %c0_i32 = arith.constant 0 : i32
    %c0_i32_0 = arith.constant 0 : i32
    %c0_i32_1 = arith.constant 0 : i32
    return %arg0, %c0_i32, %c0_i32_0 : i32, i32, i32
  }
  func.func @transform_4(%arg0: i32, %arg1: i32, %arg2: i32) -> (i32, i32, i32) {
    %c0_i32 = arith.constant 0 : i32
    %c0_i32_0 = arith.constant 0 : i32
    %c0_i32_1 = arith.constant 0 : i32
    return %arg0, %c0_i32, %c0_i32_0 : i32, i32, i32
  }
  func.func @transform_5(%arg0: i32, %arg1: i32, %arg2: i32) -> (i32, i32) {
    %c0_i32 = arith.constant 0 : i32
    %c0_i32_0 = arith.constant 0 : i32
    %c0_i32_1 = arith.constant 0 : i32
    return %c0_i32, %c0_i32_0 : i32, i32
  }
  func.func @transform_6(%arg0: i32, %arg1: i32, %arg2: i32) -> (i32, i32) {
    %c0_i32 = arith.constant 0 : i32
    %c0_i32_0 = arith.constant 0 : i32
    %c0_i32_1 = arith.constant 0 : i32
    return %c0_i32, %c0_i32_0 : i32, i32
  }
  func.func @transform_7(%arg0: i32, %arg1: i32, %arg2: i32) -> (i32, i32, i32) {
    %c1_i32 = arith.constant 1 : i32
    %0 = arith.muli %arg1, %c1_i32 : i32
    %1 = arith.addi %0, %arg2 : i32
    %c0_i32 = arith.constant 0 : i32
    %c0_i32_0 = arith.constant 0 : i32
    return %arg0, %c0_i32, %1 : i32, i32, i32
  }
  func.func @transform_8(%arg0: i32, %arg1: i32, %arg2: i32) -> (i32, i32, i32, i32) {
    %c0_i32 = arith.constant 0 : i32
    %c0_i32_0 = arith.constant 0 : i32
    %c0_i32_1 = arith.constant 0 : i32
    return %arg0, %arg1, %c0_i32, %c0_i32_0 : i32, i32, i32, i32
  }
}

</mosaic_0001>

<llo_original>
// kernel: squeeze.1
$region0: #{squeeze.1}
  %s0 = inlined_call_operand.vmem [shape: f32[2,192], index: 0, kind: input, shape index: {}]
  %s1 = inlined_call_operand.vmem [shape: f32[2,16,12,1], index: 1, kind: output, shape index: {}]
  $region1: #{squeeze.1} parent=0
    #allocation0 [shape = 'u8[8192]{0}', space=vmem, size = 0x2000, scoped, tag = 'scoped mem for input reshape']
    %s3 = sshllo.u32 0, 2
    %s4 = scalar_lea.vmem %s0, 2
    %v5 = vld [vmem:[%s4] sm:%s3]
    %s6 = scalar_lea.vmem [#allocation0], 8
    %7 = vst [vmem:[%s6] sm:%s3] %v5
    %v8 = vld [vmem:[%s0] sm:%s3]
    %9 = vst [vmem:[#allocation0] sm:%s3] %v8
    %v10 = vld [vmem:[#allocation0] sm:$0x3]
    %vm11 = vcmask 97280
    %12 = vst.msk [vmem:[%s1] ss:$16 sm:$0x3] %vm11, %v10
    %s13 = scalar_lea.vmem [#allocation0], 8
    %v14 = vld [vmem:[%s13] sm:$0x3]
    %15 = vrot.lane.b32.xlu0 %v14, 124
    %v16 = vpop.permute.xlu0 %15
    %vm17 = vcmask 97280
    %s18 = scalar_lea.vmem %s1, 11
    %19 = vst.msk [vmem:[%s18] ss:$16 sm:$0x3] %vm17, %v16
    %v20 = vld [vmem:[#allocation0] sm:$0x3]
    %21 = vrot.lane.b32.xlu0 %v20, 116
    %v22 = vpop.permute.xlu0 %21
    %vm23 = vcmask 97280
    %s24 = scalar_lea.vmem %s1, 1
    %25 = vst.msk [vmem:[%s24] ss:$16 sm:$0x3] %vm23, %v22
    %s26 = scalar_lea.vmem [#allocation0], 8
    %v27 = vld [vmem:[%s26] sm:$0x3]
    %28 = vrot.lane.b32.xlu0 %v27, 112
    %v29 = vpop.permute.xlu0 %28
    %vm30 = vcmask 97280
    %s31 = scalar_lea.vmem %s1, 12
    %32 = vst.msk [vmem:[%s31] ss:$16 sm:$0x3] %vm30, %v29
    %v33 = vld [vmem:[#allocation0] sm:$0x3]
    %34 = vrot.lane.b32.xlu0 %v33, 104
    %v35 = vpop.permute.xlu0 %34
    %vm36 = vcmask 97280
    %s37 = scalar_lea.vmem %s1, 2
    %38 = vst.msk [vmem:[%s37] ss:$16 sm:$0x3] %vm36, %v35
    %s39 = scalar_lea.vmem [#allocation0], 8
    %v40 = vld [vmem:[%s39] sm:$0x3]
    %41 = vrot.lane.b32.xlu0 %v40, 100
    %v42 = vpop.permute.xlu0 %41
    %vm43 = vcmask 97280
    %s44 = scalar_lea.vmem %s1, 13
    %45 = vst.msk [vmem:[%s44] ss:$16 sm:$0x3] %vm43, %v42
    %v46 = vld [vmem:[#allocation0] sm:$0x3]
    %47 = vrot.lane.b32.xlu0 %v46, 92
    %v48 = vpop.permute.xlu0 %47
    %vm49 = vcmask 97280
    %s50 = scalar_lea.vmem %s1, 3
    %51 = vst.msk [vmem:[%s50] ss:$16 sm:$0x3] %vm49, %v48
    %s52 = scalar_lea.vmem [#allocation0], 8
    %v53 = vld [vmem:[%s52] sm:$0x3]
    %54 = vrot.lane.b32.xlu0 %v53, 88
    %v55 = vpop.permute.xlu0 %54
    %vm56 = vcmask 97280
    %s57 = scalar_lea.vmem %s1, 14
    %58 = vst.msk [vmem:[%s57] ss:$16 sm:$0x3] %vm56, %v55
    %v59 = vld [vmem:[#allocation0] sm:$0x3]
    %60 = vrot.lane.b32.xlu0 %v59, 80
    %v61 = vpop.permute.xlu0 %60
    %vm62 = vcmask 97280
    %s63 = scalar_lea.vmem %s1, 4
    %64 = vst.msk [vmem:[%s63] ss:$16 sm:$0x3] %vm62, %v61
    %s65 = scalar_lea.vmem [#allocation0], 8
    %v66 = vld [vmem:[%s65] sm:$0x3]
    %67 = vrot.lane.b32.xlu0 %v66, 76
    %v68 = vpop.permute.xlu0 %67
    %vm69 = vcmask 97280
    %s70 = scalar_lea.vmem %s1, 15
    %71 = vst.msk [vmem:[%s70] ss:$16 sm:$0x3] %vm69, %v68
    %v72 = vld [vmem:[#allocation0] sm:$0x3]
    %73 = vrot.lane.b32.xlu0 %v72, 68
    %v74 = vpop.permute.xlu0 %73
    %vm75 = vcmask 97280
    %s76 = scalar_lea.vmem %s1, 5
    %77 = vst.msk [vmem:[%s76] ss:$16 sm:$0x3] %vm75, %v74
    %v78 = vld [vmem:[#allocation0] sm:$0x3]
    %79 = vrot.lane.b32.xlu0 %v78, 56
    %v80 = vpop.permute.xlu0 %79
    %vm81 = vcmask 97280
    %s82 = scalar_lea.vmem %s1, 6
    %83 = vst.msk [vmem:[%s82] ss:$16 sm:$0x3] %vm81, %v80
    %v84 = vld [vmem:[#allocation0] sm:$0x3]
    %85 = vrot.lane.b32.xlu0 %v84, 44
    %v86 = vpop.permute.xlu0 %85
    %vm87 = vcmask 97280
    %s88 = scalar_lea.vmem %s1, 7
    %89 = vst.msk [vmem:[%s88] ss:$16 sm:$0x3] %vm87, %v86
    %v90 = vld [vmem:[#allocation0] sm:$0x3]
    %91 = vrot.lane.b32.xlu0 %v90, 32
    %v92 = vpop.permute.xlu0 %91
    %vm93 = vcmask 97280
    %s94 = scalar_lea.vmem %s1, 8
    %95 = vst.msk [vmem:[%s94] ss:$16 sm:$0x3] %vm93, %v92
    %v96 = vld [vmem:[#allocation0] sm:$0x3]
    %97 = vrot.lane.b32.xlu0 %v96, 20
    %v98 = vpop.permute.xlu0 %97
    %vm99 = vcmask 97280
    %s100 = scalar_lea.vmem %s1, 9
    %101 = vst.msk [vmem:[%s100] ss:$16 sm:$0x3] %vm99, %v98
    %v102 = vld [vmem:[#allocation0] sm:$0x3]
    %s103 = scalar_lea.vmem [#allocation0], 8
    %v104 = vld [vmem:[%s103] sm:$0x3]
    %vm105 = vcmask 982016
    %v106 = vsel %vm105, %v104, %v102
    %107 = vrot.lane.b32.xlu0 %v106, 8
    %v108 = vpop.permute.xlu0 %107
    %vm109 = vcmask 64512
    %s110 = scalar_lea.vmem %s1, 10
    %111 = vst.msk [vmem:[%s110] ss:$16 sm:$0x3] %vm109, %v108
    %vm112 = vcmask 97344
    %s113 = scalar_lea.vmem %s1, 10
    %114 = vst.msk [vmem:[%s113] ss:$16 sm:$0x3] %vm112, %v108

// kernel: forward.3
$region0: #{forward.3}
  #allocation0 [shape = 'u32[]', space=smem, size = 0x4, offset = 0x4, fixed_abs, tag = 'smem constant byte address 0x4 - core index']
  #allocation1 [shape = 'u32[144,128]{1,0:T(1,128)}', space=vmem, size = 0x12000, scoped, tag = 'internal scratch']
  %s0 = inlined_call_operand.vmem [shape: f32[2,1,256], index: 0, kind: input, shape index: {}]
  %s1 = inlined_call_operand.vmem [shape: f32[2,1,256], index: 1, kind: output, shape index: {}]
  %s2 = sld [smem:[#allocation0]]
  $region37: #{forward.3} parent=0
    _
  %s4 = ssub.s32 1, %s2
  %s5 = scalar_select 0, %s4, %s2
  loop: start=0, step=1, limit=4
  $region2: #{forward.3} parent=0 // loop_pre_header
    _
  $region3: #{forward.3} parent=0 // loop_header
    %s7 = sphi 0, %s11
    %p8 = scmp.ge.s32.totalorder %s7, 4
    %s17 = sphi 0, %s19
    %s20 = sphi 0, %s17
    %s21 = sphi 0, %s20
    %s37 = sphi 0, %s21
    %s43 = sphi 0, %s45
    %s46 = sphi 0, %s43
    %s47 = sphi 0, %s46
    %s63 = sphi 0, %s47
  $region4: #{forward.3} parent=0 // loop_header_branch
    %10 = sbr.rel (%p8) target = $region8
  $region5: #{forward.3} parent=0 // loop_body
    %s12 = ssub.s32 %s7, 1
    %s13 = ssub.s32 %s7, 2
    %s14 = sadd.s32 %s7, 1
    %s15 = ssub.s32 %s7, %s14
    %p16 = scmp.eq.s32.totalorder %s15, 0
    %s18 = sadd.s32 %s17, 1
    %s19 = scalar_select %p16, %s17, %s18
    %p22 = pneg %p16
    %p23 = scmp.eq.s32.totalorder %s7, 1
    %p24 = por %p22, %p23
    %p25 = scmp.ne.s32.totalorder %s17, %s20
    %p26 = scmp.eq.s32.totalorder %s7, 0
    %p27 = por %p25, %p26
    %p28 = scmp.ne.s32.totalorder %s17, %s20
    %p29 = scmp.eq.s32.totalorder %s12, 1
    %p30 = por %p28, %p29
    %p31 = scmp.ne.s32.totalorder %s20, %s21
    %p32 = scmp.eq.s32.totalorder %s12, 0
    %p33 = por %p31, %p32
    %p34 = scmp.ne.s32.totalorder %s20, %s21
    %p35 = scmp.eq.s32.totalorder %s13, 1
    %p36 = por %p34, %p35
    %p38 = scmp.ne.s32.totalorder %s21, %s37
    %p39 = scmp.eq.s32.totalorder %s13, 0
    %p40 = por %p38, %p39
    %s41 = ssub.s32 %s7, %s14
    %p42 = scmp.eq.s32.totalorder %s41, 0
    %s44 = sadd.s32 %s43, 1
    %s45 = scalar_select %p42, %s43, %s44
    %p48 = pneg %p42
    %p49 = scmp.eq.s32.totalorder %s7, 1
    %p50 = por %p48, %p49
    %p51 = scmp.ne.s32.totalorder %s43, %s46
    %p52 = scmp.eq.s32.totalorder %s7, 0
    %p53 = por %p51, %p52
    %p54 = scmp.ne.s32.totalorder %s43, %s46
    %p55 = scmp.eq.s32.totalorder %s12, 1
    %p56 = por %p54, %p55
    %p57 = scmp.ne.s32.totalorder %s46, %s47
    %p58 = scmp.eq.s32.totalorder %s12, 0
    %p59 = por %p57, %p58
    %p60 = scmp.ne.s32.totalorder %s46, %s47
    %p61 = scmp.eq.s32.totalorder %s13, 1
    %p62 = por %p60, %p61
    %p64 = scmp.ne.s32.totalorder %s47, %s63
    %p65 = scmp.eq.s32.totalorder %s13, 0
    %p66 = por %p64, %p65
    %p67 = scmp.le.s32.totalorder 1, %s7
    %p68 = scmp.lt.s32.totalorder %s7, 3
    %p69 = pnand %p67, %p68
    %p70 = pneg %p69
    // Predicated region
    $region9: #{forward.3} parent=5 // pred_check
      _
    $region10: #{forward.3} parent=5 // pred_check_branch
      %72 = sbr.rel (%p69) target = $region12
    $region11: #{forward.3} parent=5 // pred_region
      %s73 = ssub.s32 %s7, 1
    $region12: #{forward.3} parent=5 // pred_fallthru
      _
    %p74 = scmp.lt.s32.totalorder %s7, 2
    // Predicated region
    $region13: #{forward.3} parent=5 // pred_check
      %p75 = pneg %p74
    $region14: #{forward.3} parent=5 // pred_check_branch
      %77 = sbr.rel (%p75) target = $region16
    $region15: #{forward.3} parent=5 // pred_region
      // Predicated region
      $region17: #{forward.3} parent=15 // pred_check
        %p78 = pneg %p27
      $region18: #{forward.3} parent=15 // pred_check_branch
        %80 = sbr.rel (%p78) target = $region20
      $region19: #{forward.3} parent=15 // pred_region
        %p81 = scmp.lt.s32.totalorder %s7, 1
        %s82 = scalar_select %p81, %s7, 1
        %s83 = smul.addr %s82, 2
        %s84 = scalar_lea.vmem %s0, %s83
      $region20: #{forward.3} parent=15 // pred_fallthru
        _
    $region16: #{forward.3} parent=5 // pred_fallthru
      _
    %p85 = scmp.le.s32.totalorder 1, %s7
    %p86 = scmp.lt.s32.totalorder %s7, 3
    %p87 = pnand %p85, %p86
    %p88 = pneg %p87
    // Predicated region
    $region21: #{forward.3} parent=5 // pred_check
      _
    $region22: #{forward.3} parent=5 // pred_check_branch
      %90 = sbr.rel (%p87) target = $region24
    $region23: #{forward.3} parent=5 // pred_region
      %s91 = ssub.s32 %s7, 1
      %p92 = scmp.lt.s32.totalorder %s12, 1
      %s93 = scalar_select %p92, %s12, 1
      %s94 = smul.addr %s93, 2
      %s95 = scalar_lea.vmem %s0, %s94
      %p96 = pneg %p33
      %p97 = pneg %p30
      %p98 = pneg %p59
      %p99 = pneg %p56
      %p100 = scmp.lt.s32.totalorder %s12, 1
      %s101 = scalar_select %p100, %s12, 1
      %s102 = smul.addr %s101, 2
      %s103 = scalar_lea.vmem %s1, %s102
      %p104 = scmp.lt.s32.totalorder %s12, 1
      %s105 = scalar_select %p104, %s12, 1
      %s106 = smul.addr %s105, 2
      %s107 = scalar_lea.vmem %s0, %s106
      %p108 = scmp.lt.s32.totalorder %s12, 1
      %s109 = scalar_select %p108, %s12, 1
      %s110 = smul.addr %s109, 2
      %s111 = scalar_lea.vmem %s1, %s110
      %v112 = vld [vmem:[%s107] sm:$0x3]
      %v113 = vlaneseq
      %v114 = vand.u32 %v113, 127
      %v115 = vadd.s32 %v114, 128
      %vm116 = vcmp.lt.s32.totalorder %v114, 192
      %vm117 = vcmp.lt.s32.totalorder %v115, 192
      %v119 = vlaneseq
      %v120 = vshrl.u32 %v119, 7
      %v121 = vsub.s32 0, %v120
      %v122 = vrot.slane %v112, %v121
      %v123 = vlaneseq
      %v124 = vshrl.u32 %v123, 7
      %v125 = vsub.s32 1, %v124
      %v126 = vrot.slane %v112, %v125
      %v129 = vsel %vm116, %v122, -3.4028235e+38
      %v130 = vsel %vm117, %v126, -3.4028235e+38
      %vm131 = vcmask 1040384
      %v132 = vsel %vm131, %v129, -inf
      %v133 = vsel %vm131, %v130, -inf
      %v134 = vmax.f32 %v132, %v133
      %135 = vmax.xlane.f32.xlu0 %v134
      %v136 = vpop.xlane.xlu0 %135
      %v137 = vrot.slane %v136, 4
      %v138 = vmax.f32 %v136, %v137
      %v139 = vrot.slane %v138, 2
      %v140 = vmax.f32 %v138, %v139
      %v141 = vrot.slane %v140, 1
      %v142 = vmax.f32 %v140, %v141
      %s143 = vtos %v142
      %v144 = vstv %s143
      %v145 = vsub.f32 %v112, %v144
      %v146 = vmul.f32 %v145, 1.442695
      %v147 = vpow.pop %v146
      %v149 = vlaneseq
      %v150 = vshrl.u32 %v149, 7
      %v151 = vsub.s32 0, %v150
      %v152 = vrot.slane %v147, %v151
      %v153 = vlaneseq
      %v154 = vshrl.u32 %v153, 7
      %v155 = vsub.s32 1, %v154
      %v156 = vrot.slane %v147, %v155
      %v159 = vsel %vm116, %v152, 0.0
      %v160 = vsel %vm117, %v156, 0.0
      %v161 = vsel %vm131, %v159, 0.0
      %v162 = vsel %vm131, %v160, 0.0
      %v163 = vadd.f32 %v161, %v162
      %164 = vadd.xlane.f32.xlu0 %v163
      %v165 = vpop.xlane.xlu0 %164
      %v166 = vrot.slane %v165, 4
      %v167 = vadd.f32 %v165, %v166
      %v168 = vrot.slane %v167, 2
      %v169 = vadd.f32 %v167, %v168
      %v170 = vrot.slane %v169, 1
      %v171 = vadd.f32 %v169, %v170
      %s172 = vtos %v171
      %v173 = vstv %s172
      %v174 = vrcp.pop %v173
      %v175 = vmul.f32 %v159, %v174
      %v176 = vmul.f32 %v160, %v174
      %v179 = vcombine.low %v175, %v176
      %v181 = vunpack.c.l.s4 1966171168
      %v182 = vunpack.c.0.s8 %v181
      %v183 = vlaneseq
      %v184 = vshrl.u32 %v183, 7
      %v185 = vsub.s32 %v182, %v184
      %v186 = vrot.slane %v179, %v185
      %v188 = vunpack.c.l.s4 1966171168
      %v189 = vunpack.c.0.s8 %v188
      %v190 = vlaneseq
      %v191 = vshrl.u32 %v190, 7
      %v192 = vsub.s32 %v189, %v191
      %v193 = vrot.slane %v186, %v192
      %v195 = vlaneseq
      %vm196 = vcmp.ge.s32.totalorder %v195, 0
      %vm197 = vcmp.lt.s32.totalorder %v195, 256
      %vm198 = vmand %vm196, %vm197
      %199 = vst.msk [vmem:[%s111] sm:$0x3] %vm198, %v193
      %p200 = scmp.lt.s32.totalorder %s12, 1
      %s201 = scalar_select %p200, %s12, 1
      %s202 = smul.addr %s201, 2
      %s203 = scalar_lea.vmem %s1, %s202
      // Predicated region
      $region25: #{forward.3} parent=23 // pred_check
        %p204 = pneg %p56
      $region26: #{forward.3} parent=23 // pred_check_branch
        %206 = sbr.rel (%p204) target = $region28
      $region27: #{forward.3} parent=23 // pred_region
        _
      $region28: #{forward.3} parent=23 // pred_fallthru
        _
    $region24: #{forward.3} parent=5 // pred_fallthru
      _
    %p207 = scmp.le.s32.totalorder 2, %s7
    // Predicated region
    $region29: #{forward.3} parent=5 // pred_check
      %p208 = pneg %p207
    $region30: #{forward.3} parent=5 // pred_check_branch
      %210 = sbr.rel (%p208) target = $region32
    $region31: #{forward.3} parent=5 // pred_region
      %s211 = ssub.s32 %s7, 2
      // Predicated region
      $region33: #{forward.3} parent=31 // pred_check
        %p212 = pneg %p62
      $region34: #{forward.3} parent=31 // pred_check_branch
        %214 = sbr.rel (%p212) target = $region36
      $region35: #{forward.3} parent=31 // pred_region
        %p215 = scmp.lt.s32.totalorder %s13, 1
        %s216 = scalar_select %p215, %s13, 1
        %s217 = smul.addr %s216, 2
        %s218 = scalar_lea.vmem %s1, %s217
      $region36: #{forward.3} parent=31 // pred_fallthru
        _
    $region32: #{forward.3} parent=5 // pred_fallthru
      _
  $region6: #{forward.3} parent=0 // loop_footer
    %s11 = sadd.s32 1, %s7
  $region7: #{forward.3} parent=0 // loop_footer_branch
    %6 = sbr.rel target = $region3
  $region8: #{forward.3} parent=0 // loop_exit
    _

// kernel: forward.2
$region0: #{forward.2}
  #allocation0 [shape = 'u32[]', space=smem, size = 0x4, offset = 0x4, fixed_abs, tag = 'smem constant byte address 0x4 - core index']
  #allocation1 [shape = 'u32[144,128]{1,0:T(1,128)}', space=vmem, size = 0x12000, scoped, tag = 'internal scratch']
  #allocation2 [shape = 'f32[32,128]{1,0:T(8,128)}', space=vmem, size = 0x4000, scoped, tag = 'scratch operand']
  #allocation3 [shape = 'f32[1,1]{1,0:T(1,128)S(1)}', space=vmem, size = 0x200, scoped, tag = 'scoped memory for forward.2']
  %s0 = inlined_call_operand.vmem [shape: bf16[2,4,256], index: 0, kind: input, shape index: {}]
  %s1 = inlined_call_operand.vmem [shape: bf16[32,4], index: 1, kind: input, shape index: {}]
  %s2 = inlined_call_operand.vmem [shape: f32[32,1], index: 2, kind: input, shape index: {}]
  %s3 = inlined_call_operand.vmem [shape: f32[2,32,1], index: 3, kind: input, shape index: {}]
  %s4 = inlined_call_operand.vmem [shape: f32[2,32,1], index: 4, kind: input, shape index: {}]
  %s5 = inlined_call_operand.vmem [shape: bf16[1,32], index: 5, kind: input, shape index: {}]
  %s6 = inlined_call_operand.<no memory space> [shape: f32[1,1], index: 6, kind: input, shape index: {}]
  %s7 = inlined_call_operand.vmem [shape: f32[2,1,256], index: 7, kind: output, shape index: {0}]
  %s8 = inlined_call_operand.vmem [shape: f32[2,1,32,128], index: 8, kind: output, shape index: {1}]
  %9 = xla_tuple %s7, %s8
  %s10 = sld [smem:[#allocation0]]
  $region81: #{forward.2} parent=0
    _
  %s12 = ssub.s32 1, %s10
  %s13 = scalar_select 0, %s12, %s10
  %v14 = vstv %s6
  %15 = vst [vmem:[#allocation3] sm:$0x1] %v14
  loop: start=0, step=1, limit=4
  $region2: #{forward.2} parent=0 // loop_pre_header
    _
  $region3: #{forward.2} parent=0 // loop_header
    %s17 = sphi 0, %s21
    %p18 = scmp.ge.s32.totalorder %s17, 4
    %s24 = sphi 0, %s43
    %s25 = sphi 0, %s39
    %s26 = sphi 0, %s35
    %s27 = sphi 0, %s24
    %s28 = sphi 0, %s25
    %s29 = sphi 0, %s26
    %s30 = sphi 0, %s27
    %s31 = sphi 0, %s28
    %s32 = sphi 0, %s29
    %s50 = sphi 0, %s52
    %s53 = sphi 0, %s50
    %s54 = sphi 0, %s53
    %s70 = sphi 0, %s54
    %s74 = sphi 0, %s74
    %s76 = sphi 0, %s74
    %s77 = sphi 0, %s76
    %s91 = sphi 0, %s77
    %s95 = sphi 0, %s95
    %s97 = sphi 0, %s95
    %s98 = sphi 0, %s97
    %s112 = sphi 0, %s98
    %s118 = sphi 0, %s120
    %s121 = sphi 0, %s118
    %s122 = sphi 0, %s121
    %s138 = sphi 0, %s122
    %s144 = sphi 0, %s146
    %s147 = sphi 0, %s144
    %s148 = sphi 0, %s147
    %s164 = sphi 0, %s148
    %s168 = sphi 0, %s168
    %s170 = sphi 0, %s168
    %s171 = sphi 0, %s170
    %s185 = sphi 0, %s171
    %s189 = sphi 0, %s189
    %s191 = sphi 0, %s189
    %s192 = sphi 0, %s191
    %s206 = sphi 0, %s192
    %s216 = sphi 0, %s218
    %s219 = sphi 0, %s216
    %s220 = sphi 0, %s219
    %s236 = sphi 0, %s220
    %s244 = sphi 0, %s246
    %s247 = sphi 0, %s244
    %s248 = sphi 0, %s247
    %s264 = sphi 0, %s248
  $region4: #{forward.2} parent=0 // loop_header_branch
    %20 = sbr.rel (%p18) target = $region8
  $region5: #{forward.2} parent=0 // loop_body
    %s22 = ssub.s32 %s17, 1
    %s23 = ssub.s32 %s17, 2
    %s33 = sadd.s32 1, %s26
    %p34 = scmp.ge.s32.totalorder %s33, 1
    %s35 = scalar_select %p34, 0, %s33
    %s36 = sadd.s32 1, %s25
    %s37 = scalar_select %p34, %s36, %s25
    %p38 = scmp.ge.s32.totalorder %s37, 1
    %s39 = scalar_select %p38, 0, %s37
    %s40 = sadd.s32 1, %s24
    %s41 = scalar_select %p38, %s40, %s24
    %p42 = scmp.ge.s32.totalorder %s41, 2
    %s43 = scalar_select %p42, 0, %s41
    %s44 = sadd.s32 %s25, %s26
    %s45 = sadd.s32 %s39, %s35
    %s46 = ssub.s32 %s24, %s43
    %s47 = ssub.s32 %s44, %s45
    %s48 = sor.u32 %s46, %s47
    %p49 = scmp.eq.s32.totalorder %s48, 0
    %s51 = sadd.s32 %s50, 1
    %s52 = scalar_select %p49, %s50, %s51
    %p55 = pneg %p49
    %p56 = scmp.eq.s32.totalorder %s17, 1
    %p57 = por %p55, %p56
    %p58 = scmp.ne.s32.totalorder %s50, %s53
    %p59 = scmp.eq.s32.totalorder %s17, 0
    %p60 = por %p58, %p59
    %p61 = scmp.ne.s32.totalorder %s50, %s53
    %p62 = scmp.eq.s32.totalorder %s22, 1
    %p63 = por %p61, %p62
    %p64 = scmp.ne.s32.totalorder %s53, %s54
    %p65 = scmp.eq.s32.totalorder %s22, 0
    %p66 = por %p64, %p65
    %p67 = scmp.ne.s32.totalorder %s53, %s54
    %p68 = scmp.eq.s32.totalorder %s23, 1
    %p69 = por %p67, %p68
    %p71 = scmp.ne.s32.totalorder %s54, %s70
    %p72 = scmp.eq.s32.totalorder %s23, 0
    %p73 = por %p71, %p72
    %s75 = sadd.s32 %s74, 1
    %p78 = scmp.eq.s32.totalorder %s17, 1
    %p79 = scmp.ne.s32.totalorder %s74, %s76
    %p80 = scmp.eq.s32.totalorder %s17, 0
    %p81 = por %p79, %p80
    %p82 = scmp.ne.s32.totalorder %s74, %s76
    %p83 = scmp.eq.s32.totalorder %s22, 1
    %p84 = por %p82, %p83
    %p85 = scmp.ne.s32.totalorder %s76, %s77
    %p86 = scmp.eq.s32.totalorder %s22, 0
    %p87 = por %p85, %p86
    %p88 = scmp.ne.s32.totalorder %s76, %s77
    %p89 = scmp.eq.s32.totalorder %s23, 1
    %p90 = por %p88, %p89
    %p92 = scmp.ne.s32.totalorder %s77, %s91
    %p93 = scmp.eq.s32.totalorder %s23, 0
    %p94 = por %p92, %p93
    %s96 = sadd.s32 %s95, 1
    %p99 = scmp.eq.s32.totalorder %s17, 1
    %p100 = scmp.ne.s32.totalorder %s95, %s97
    %p101 = scmp.eq.s32.totalorder %s17, 0
    %p102 = por %p100, %p101
    %p103 = scmp.ne.s32.totalorder %s95, %s97
    %p104 = scmp.eq.s32.totalorder %s22, 1
    %p105 = por %p103, %p104
    %p106 = scmp.ne.s32.totalorder %s97, %s98
    %p107 = scmp.eq.s32.totalorder %s22, 0
    %p108 = por %p106, %p107
    %p109 = scmp.ne.s32.totalorder %s97, %s98
    %p110 = scmp.eq.s32.totalorder %s23, 1
    %p111 = por %p109, %p110
    %p113 = scmp.ne.s32.totalorder %s98, %s112
    %p114 = scmp.eq.s32.totalorder %s23, 0
    %p115 = por %p113, %p114
    %s116 = ssub.s32 %s24, %s43
    %p117 = scmp.eq.s32.totalorder %s116, 0
    %s119 = sadd.s32 %s118, 1
    %s120 = scalar_select %p117, %s118, %s119
    %p123 = pneg %p117
    %p124 = scmp.eq.s32.totalorder %s17, 1
    %p125 = por %p123, %p124
    %p126 = scmp.ne.s32.totalorder %s118, %s121
    %p127 = scmp.eq.s32.totalorder %s17, 0
    %p128 = por %p126, %p127
    %p129 = scmp.ne.s32.totalorder %s118, %s121
    %p130 = scmp.eq.s32.totalorder %s22, 1
    %p131 = por %p129, %p130
    %p132 = scmp.ne.s32.totalorder %s121, %s122
    %p133 = scmp.eq.s32.totalorder %s22, 0
    %p134 = por %p132, %p133
    %p135 = scmp.ne.s32.totalorder %s121, %s122
    %p136 = scmp.eq.s32.totalorder %s23, 1
    %p137 = por %p135, %p136
    %p139 = scmp.ne.s32.totalorder %s122, %s138
    %p140 = scmp.eq.s32.totalorder %s23, 0
    %p141 = por %p139, %p140
    %s142 = ssub.s32 %s24, %s43
    %p143 = scmp.eq.s32.totalorder %s142, 0
    %s145 = sadd.s32 %s144, 1
    %s146 = scalar_select %p143, %s144, %s145
    %p149 = pneg %p143
    %p150 = scmp.eq.s32.totalorder %s17, 1
    %p151 = por %p149, %p150
    %p152 = scmp.ne.s32.totalorder %s144, %s147
    %p153 = scmp.eq.s32.totalorder %s17, 0
    %p154 = por %p152, %p153
    %p155 = scmp.ne.s32.totalorder %s144, %s147
    %p156 = scmp.eq.s32.totalorder %s22, 1
    %p157 = por %p155, %p156
    %p158 = scmp.ne.s32.totalorder %s147, %s148
    %p159 = scmp.eq.s32.totalorder %s22, 0
    %p160 = por %p158, %p159
    %p161 = scmp.ne.s32.totalorder %s147, %s148
    %p162 = scmp.eq.s32.totalorder %s23, 1
    %p163 = por %p161, %p162
    %p165 = scmp.ne.s32.totalorder %s148, %s164
    %p166 = scmp.eq.s32.totalorder %s23, 0
    %p167 = por %p165, %p166
    %s169 = sadd.s32 %s168, 1
    %p172 = scmp.eq.s32.totalorder %s17, 1
    %p173 = scmp.ne.s32.totalorder %s168, %s170
    %p174 = scmp.eq.s32.totalorder %s17, 0
    %p175 = por %p173, %p174
    %p176 = scmp.ne.s32.totalorder %s168, %s170
    %p177 = scmp.eq.s32.totalorder %s22, 1
    %p178 = por %p176, %p177
    %p179 = scmp.ne.s32.totalorder %s170, %s171
    %p180 = scmp.eq.s32.totalorder %s22, 0
    %p181 = por %p179, %p180
    %p182 = scmp.ne.s32.totalorder %s170, %s171
    %p183 = scmp.eq.s32.totalorder %s23, 1
    %p184 = por %p182, %p183
    %p186 = scmp.ne.s32.totalorder %s171, %s185
    %p187 = scmp.eq.s32.totalorder %s23, 0
    %p188 = por %p186, %p187
    %s190 = sadd.s32 %s189, 1
    %p193 = scmp.eq.s32.totalorder %s17, 1
    %p194 = scmp.ne.s32.totalorder %s189, %s191
    %p195 = scmp.eq.s32.totalorder %s17, 0
    %p196 = por %p194, %p195
    %p197 = scmp.ne.s32.totalorder %s189, %s191
    %p198 = scmp.eq.s32.totalorder %s22, 1
    %p199 = por %p197, %p198
    %p200 = scmp.ne.s32.totalorder %s191, %s192
    %p201 = scmp.eq.s32.totalorder %s22, 0
    %p202 = por %p200, %p201
    %p203 = scmp.ne.s32.totalorder %s191, %s192
    %p204 = scmp.eq.s32.totalorder %s23, 1
    %p205 = por %p203, %p204
    %p207 = scmp.ne.s32.totalorder %s192, %s206
    %p208 = scmp.eq.s32.totalorder %s23, 0
    %p209 = por %p207, %p208
    %s210 = sadd.s32 %s25, %s26
    %s211 = sadd.s32 %s39, %s35
    %s212 = ssub.s32 %s24, %s43
    %s213 = ssub.s32 %s210, %s211
    %s214 = sor.u32 %s212, %s213
    %p215 = scmp.eq.s32.totalorder %s214, 0
    %s217 = sadd.s32 %s216, 1
    %s218 = scalar_select %p215, %s216, %s217
    %p221 = pneg %p215
    %p222 = scmp.eq.s32.totalorder %s17, 1
    %p223 = por %p221, %p222
    %p224 = scmp.ne.s32.totalorder %s216, %s219
    %p225 = scmp.eq.s32.totalorder %s17, 0
    %p226 = por %p224, %p225
    %p227 = scmp.ne.s32.totalorder %s216, %s219
    %p228 = scmp.eq.s32.totalorder %s22, 1
    %p229 = por %p227, %p228
    %p230 = scmp.ne.s32.totalorder %s219, %s220
    %p231 = scmp.eq.s32.totalorder %s22, 0
    %p232 = por %p230, %p231
    %p233 = scmp.ne.s32.totalorder %s219, %s220
    %p234 = scmp.eq.s32.totalorder %s23, 1
    %p235 = por %p233, %p234
    %p237 = scmp.ne.s32.totalorder %s220, %s236
    %p238 = scmp.eq.s32.totalorder %s23, 0
    %p239 = por %p237, %p238
    %s240 = ssub.s32 %s24, %s43
    %s241 = ssub.s32 %s25, %s39
    %s242 = sor.u32 %s240, %s241
    %p243 = scmp.eq.s32.totalorder %s242, 0
    %s245 = sadd.s32 %s244, 1
    %s246 = scalar_select %p243, %s244, %s245
    %p249 = pneg %p243
    %p250 = scmp.eq.s32.totalorder %s17, 1
    %p251 = por %p249, %p250
    %p252 = scmp.ne.s32.totalorder %s244, %s247
    %p253 = scmp.eq.s32.totalorder %s17, 0
    %p254 = por %p252, %p253
    %p255 = scmp.ne.s32.totalorder %s244, %s247
    %p256 = scmp.eq.s32.totalorder %s22, 1
    %p257 = por %p255, %p256
    %p258 = scmp.ne.s32.totalorder %s247, %s248
    %p259 = scmp.eq.s32.totalorder %s22, 0
    %p260 = por %p258, %p259
    %p261 = scmp.ne.s32.totalorder %s247, %s248
    %p262 = scmp.eq.s32.totalorder %s23, 1
    %p263 = por %p261, %p262
    %p265 = scmp.ne.s32.totalorder %s248, %s264
    %p266 = scmp.eq.s32.totalorder %s23, 0
    %p267 = por %p265, %p266
    %p268 = scmp.le.s32.totalorder 1, %s17
    %p269 = scmp.lt.s32.totalorder %s17, 3
    %p270 = pnand %p268, %p269
    %p271 = pneg %p270
    // Predicated region
    $region9: #{forward.2} parent=5 // pred_check
      _
    $region10: #{forward.2} parent=5 // pred_check_branch
      %273 = sbr.rel (%p270) target = $region12
    $region11: #{forward.2} parent=5 // pred_region
      %s274 = ssub.s32 %s17, 1
      // Predicated region
      $region13: #{forward.2} parent=11 // pred_check
        %p275 = pneg %p87
      $region14: #{forward.2} parent=11 // pred_check_branch
        %277 = sbr.rel (%p275) target = $region16
      $region15: #{forward.2} parent=11 // pred_region
        _
      $region16: #{forward.2} parent=11 // pred_fallthru
        _
      // Predicated region
      $region17: #{forward.2} parent=11 // pred_check
        %p278 = pneg %p108
      $region18: #{forward.2} parent=11 // pred_check_branch
        %280 = sbr.rel (%p278) target = $region20
      $region19: #{forward.2} parent=11 // pred_region
        _
      $region20: #{forward.2} parent=11 // pred_fallthru
        _
      // Predicated region
      $region21: #{forward.2} parent=11 // pred_check
        %p281 = pneg %p181
      $region22: #{forward.2} parent=11 // pred_check_branch
        %283 = sbr.rel (%p281) target = $region24
      $region23: #{forward.2} parent=11 // pred_region
        _
      $region24: #{forward.2} parent=11 // pred_fallthru
        _
      // Predicated region
      $region25: #{forward.2} parent=11 // pred_check
        %p284 = pneg %p202
      $region26: #{forward.2} parent=11 // pred_check_branch
        %286 = sbr.rel (%p284) target = $region28
      $region27: #{forward.2} parent=11 // pred_region
        _
      $region28: #{forward.2} parent=11 // pred_fallthru
        _
    $region12: #{forward.2} parent=5 // pred_fallthru
      _
    %p287 = scmp.lt.s32.totalorder %s17, 2
    // Predicated region
    $region29: #{forward.2} parent=5 // pred_check
      %p288 = pneg %p287
    $region30: #{forward.2} parent=5 // pred_check_branch
      %290 = sbr.rel (%p288) target = $region32
    $region31: #{forward.2} parent=5 // pred_region
      // Predicated region
      $region33: #{forward.2} parent=31 // pred_check
        %p291 = pneg %p60
      $region34: #{forward.2} parent=31 // pred_check_branch
        %293 = sbr.rel (%p291) target = $region36
      $region35: #{forward.2} parent=31 // pred_region
        %s294 = sadd.s32 %s25, %s26
        %s295 = smul.u32 2, %s294
        %p296 = scmp.lt.s32.totalorder %s24, 1
        %s297 = scalar_select %p296, %s24, 1
        %p298 = scmp.lt.s32.totalorder %s295, 1
        %s299 = scalar_select %p298, %s295, 1
        %s300 = smul.addr %s297, 2
        %s301 = sadd.s32 %s299, %s300
        %s302 = smul.addr %s301, 2
        %s303 = scalar_lea.vmem %s0, %s302
        %s304 = sadd.s32 %s25, %s26
        %s305 = smul.u32 2, %s304
      $region36: #{forward.2} parent=31 // pred_fallthru
        _
      // Predicated region
      $region37: #{forward.2} parent=31 // pred_check
        %p306 = pneg %p128
      $region38: #{forward.2} parent=31 // pred_check_branch
        %308 = sbr.rel (%p306) target = $region40
      $region39: #{forward.2} parent=31 // pred_region
        %p309 = scmp.lt.s32.totalorder %s24, 1
        %s310 = scalar_select %p309, %s24, 1
        %s311 = smul.addr %s310, 4
        %s312 = smul.addr %s311, 8
        %s313 = scalar_lea.vmem %s3, %s312
      $region40: #{forward.2} parent=31 // pred_fallthru
        _
      // Predicated region
      $region41: #{forward.2} parent=31 // pred_check
        %p314 = pneg %p154
      $region42: #{forward.2} parent=31 // pred_check_branch
        %316 = sbr.rel (%p314) target = $region44
      $region43: #{forward.2} parent=31 // pred_region
        %p317 = scmp.lt.s32.totalorder %s24, 1
        %s318 = scalar_select %p317, %s24, 1
        %s319 = smul.addr %s318, 4
        %s320 = smul.addr %s319, 8
        %s321 = scalar_lea.vmem %s4, %s320
      $region44: #{forward.2} parent=31 // pred_fallthru
        _
    $region32: #{forward.2} parent=5 // pred_fallthru
      _
    %p322 = scmp.le.s32.totalorder 1, %s17
    %p323 = scmp.lt.s32.totalorder %s17, 3
    %p324 = pnand %p322, %p323
    %p325 = pneg %p324
    // Predicated region
    $region45: #{forward.2} parent=5 // pred_check
      _
    $region46: #{forward.2} parent=5 // pred_check_branch
      %327 = sbr.rel (%p324) target = $region48
    $region47: #{forward.2} parent=5 // pred_region
      %s328 = ssub.s32 %s17, 1
      %s329 = sadd.s32 %s28, %s29
      %s330 = smul.u32 2, %s329
      %p331 = scmp.lt.s32.totalorder %s27, 1
      %s332 = scalar_select %p331, %s27, 1
      %p333 = scmp.lt.s32.totalorder %s330, 1
      %s334 = scalar_select %p333, %s330, 1
      %s335 = smul.addr %s332, 2
      %s336 = sadd.s32 %s334, %s335
      %s337 = smul.addr %s336, 2
      %s338 = scalar_lea.vmem %s0, %s337
      %p339 = pneg %p66
      %p340 = pneg %p63
      %p341 = pneg %p87
      %p342 = pneg %p84
      %p343 = pneg %p108
      %p344 = pneg %p105
      %p345 = scmp.lt.s32.totalorder %s27, 1
      %s346 = scalar_select %p345, %s27, 1
      %s347 = smul.addr %s346, 4
      %s348 = smul.addr %s347, 8
      %s349 = scalar_lea.vmem %s3, %s348
      %p350 = pneg %p134
      %p351 = pneg %p131
      %p352 = scmp.lt.s32.totalorder %s27, 1
      %s353 = scalar_select %p352, %s27, 1
      %s354 = smul.addr %s353, 4
      %s355 = smul.addr %s354, 8
      %s356 = scalar_lea.vmem %s4, %s355
      %p357 = pneg %p160
      %p358 = pneg %p157
      %p359 = pneg %p181
      %p360 = pneg %p178
      %p361 = pneg %p202
      %p362 = pneg %p199
      %p363 = pneg %p232
      %p364 = pneg %p229
      %s365 = sadd.s32 %s28, %s29
      %s366 = smul.u32 2, %s365
      %p367 = scmp.lt.s32.totalorder %s27, 1
      %s368 = scalar_select %p367, %s27, 1
      %p369 = scmp.lt.s32.totalorder %s366, 1
      %s370 = scalar_select %p369, %s366, 1
      %s371 = smul.addr %s368, 2
      %s372 = sadd.s32 %s370, %s371
      %s373 = scalar_lea.vmem %s7, %s372
      %p374 = pneg %p260
      %p375 = pneg %p257
      %p376 = scmp.lt.s32.totalorder %s27, 1
      %s377 = scalar_select %p376, %s27, 1
      %p378 = scmp.lt.s32.totalorder %s28, 0
      %s379 = scalar_select %p378, %s28, 0
      %s380 = smul.addr %s379, 4
      %s381 = smul.addr %s377, 4
      %s382 = sadd.s32 %s380, %s381
      %s383 = smul.addr %s382, 8
      %s384 = scalar_lea.vmem %s8, %s383
      %s385 = sadd.s32 %s28, %s29
      %s386 = smul.u32 2, %s385
      %p387 = scmp.lt.s32.totalorder %s27, 1
      %s388 = scalar_select %p387, %s27, 1
      %p389 = scmp.lt.s32.totalorder %s386, 1
      %s390 = scalar_select %p389, %s386, 1
      %s391 = smul.addr %s388, 2
      %s392 = sadd.s32 %s390, %s391
      %s393 = smul.addr %s392, 2
      %s394 = scalar_lea.vmem %s0, %s393
      %s395 = sadd.s32 %s28, %s29
      %s396 = smul.u32 2, %s395
      %p397 = scmp.lt.s32.totalorder %s27, 1
      %s398 = scalar_select %p397, %s27, 1
      %s399 = smul.addr %s398, 4
      %s400 = smul.addr %s399, 8
      %s401 = scalar_lea.vmem %s3, %s400
      %p402 = scmp.lt.s32.totalorder %s27, 1
      %s403 = scalar_select %p402, %s27, 1
      %s404 = smul.addr %s403, 4
      %s405 = smul.addr %s404, 8
      %s406 = scalar_lea.vmem %s4, %s405
      %s407 = sadd.s32 %s28, %s29
      %s408 = smul.u32 2, %s407
      %p409 = scmp.lt.s32.totalorder %s27, 1
      %s410 = scalar_select %p409, %s27, 1
      %p411 = scmp.lt.s32.totalorder %s408, 1
      %s412 = scalar_select %p411, %s408, 1
      %s413 = smul.addr %s410, 2
      %s414 = sadd.s32 %s412, %s413
      %s415 = scalar_lea.vmem %s7, %s414
      %s416 = sadd.s32 %s28, %s29
      %s417 = smul.u32 2, %s416
      %p418 = scmp.lt.s32.totalorder %s27, 1
      %s419 = scalar_select %p418, %s27, 1
      %p420 = scmp.lt.s32.totalorder %s28, 0
      %s421 = scalar_select %p420, %s28, 0
      %s422 = smul.addr %s421, 4
      %s423 = smul.addr %s419, 4
      %s424 = sadd.s32 %s422, %s423
      %s425 = smul.addr %s424, 8
      %s426 = scalar_lea.vmem %s8, %s425
      %v428 = vld [vmem:[%s394] sm:$0xf]
      %v429 = vld [vmem:[%s1] sm:$0xf]
      %v430 = vld [vmem:[%s1 + $0x4] sm:$0xf]
      %v431 = vld [vmem:[%s1 + $0x8] sm:$0xf]
      %v432 = vld [vmem:[%s1 + $0xc] sm:$0xf]
      %v433 = vld [vmem:[%s2] sm:$0xff]
      %v434 = vld [vmem:[%s2 + $0x8] sm:$0xff]
      %v435 = vld [vmem:[%s2 + $0x10] sm:$0xff]
      %v436 = vld [vmem:[%s2 + $0x18] sm:$0xff]
      %438 = vset.pattern.permute.xlu0 0
      %439 = vperm.xlu0 %438, %v433
      %v440 = vpop.permute.xlu0 %439
      %443 = vset.pattern.permute.xlu0 0
      %444 = vperm.xlu0 %443, %v434
      %v445 = vpop.permute.xlu0 %444
      %448 = vset.pattern.permute.xlu0 0
      %449 = vperm.xlu0 %448, %v435
      %v450 = vpop.permute.xlu0 %449
      %453 = vset.pattern.permute.xlu0 0
      %454 = vperm.xlu0 %453, %v436
      %v455 = vpop.permute.xlu0 %454
      %v461 = vunpack.c.l.b16 %v429
      %v462 = vunpack.c.l.b16 %v430
      %v463 = vunpack.c.l.b16 %v431
      %v464 = vunpack.c.l.b16 %v432
      %v465 = vpack.c.b16 %v462, %v461
      %v466 = vpack.c.b16 %v464, %v463
      %v469 = vunpack.c.l.s4 1983009808
      %v470 = vunpack.c.0.s8 %v469
      %v471 = vlaneseq
      %v472 = vshrl.u32 %v471, 7
      %v473 = vsub.s32 %v470, %v472
      %v474 = vrot.slane %v428, %v473
      %v475 = vcombine.high %v474, %v474
      %vm476 = vcmask 31744
      %v478 = vsel %vm476, %v465, 0
      %v481 = vsel %vm476, %v466, 0
      %vm483 = vcmask 1041408
      %v485 = vsel %vm483, %v474, 0
      %v488 = vsel %vm483, %v475, 0
      %490 = vmatprep.subr.bf16.mxu0 %v488
      %491 = vmatpush1.bf16.msra.mxu0 %v485
      %492 = vmatprep.subr.bf16.mxu0 0
      %493 = vmatpush1.bf16.msra.mxu0 0
      %494 = vmatprep.subr.bf16.mxu0 0
      %495 = vmatpush1.bf16.msra.mxu0 0
      %496 = vmatprep.subr.bf16.mxu0 0
      %497 = vmatpush1.bf16.msra.mxu0 0
      %498 = vmatprep.subr.bf16.mxu0 0
      %499 = vmatpush1.bf16.msra.mxu0 0
      %500 = vmatprep.subr.bf16.mxu0 0
      %501 = vmatpush1.bf16.msra.mxu0 0
      %502 = vmatprep.subr.bf16.mxu0 0
      %503 = vmatpush1.bf16.msra.mxu0 0
      %504 = vmatprep.subr.bf16.mxu0 0
      %505 = vmatpush1.bf16.msra.mxu0 0
      %506 = vmatprep.subr.bf16.mxu0 0
      %507 = vmatpush1.bf16.msra.mxu0 0
      %508 = vmatprep.subr.bf16.mxu0 0
      %509 = vmatpush1.bf16.msra.mxu0 0
      %510 = vmatprep.subr.bf16.mxu0 0
      %511 = vmatpush1.bf16.msra.mxu0 0
      %512 = vmatprep.subr.bf16.mxu0 0
      %513 = vmatpush1.bf16.msra.mxu0 0
      %514 = vmatprep.subr.bf16.mxu0 0
      %515 = vmatpush1.bf16.msra.mxu0 0
      %516 = vmatprep.subr.bf16.mxu0 0
      %517 = vmatpush1.bf16.msra.mxu0 0
      %518 = vmatprep.subr.bf16.mxu0 0
      %519 = vmatpush1.bf16.msra.mxu0 0
      %520 = vmatprep.subr.bf16.mxu0 0
      %521 = vmatpush1.bf16.msra.mxu0 0
      %522 = vmatprep.mubr.bf16.mxu0 0
      %523 = vmatmul.mubr.bf16.gmra.mrb[0].mxu0 %v478
      %v524 = vpop.f32.mrb[0].mxu0
      %v525 = vadd.f32 %v440, %v524
      %v526 = vpop.f32.mrb[0].mxu0
      %v527 = vadd.f32 %v440, %v526
      %v528 = vpop.f32.mrb[0].mxu0
      %v529 = vadd.f32 %v445, %v528
      %v530 = vpop.f32.mrb[0].mxu0
      %v531 = vadd.f32 %v445, %v530
      %532 = vmatprep.mubr.bf16.mxu0 0
      %533 = vmatmul.mubr.bf16.gmra.mrb[0].mxu0 %v481
      %v534 = vpop.f32.mrb[0].mxu0
      %v535 = vadd.f32 %v450, %v534
      %v536 = vpop.f32.mrb[0].mxu0
      %v537 = vadd.f32 %v450, %v536
      %v538 = vpop.f32.mrb[0].mxu0
      %v539 = vadd.f32 %v455, %v538
      %v540 = vpop.f32.mrb[0].mxu0
      %v541 = vadd.f32 %v455, %v540
      %542 = vdwg.mxu0
      %v543 = vmax.f32 %v525, 0.0
      %v544 = vmax.f32 %v527, 0.0
      %v545 = vmax.f32 %v529, 0.0
      %v546 = vmax.f32 %v531, 0.0
      %v547 = vmax.f32 %v535, 0.0
      %v548 = vmax.f32 %v537, 0.0
      %v549 = vmax.f32 %v539, 0.0
      %v550 = vmax.f32 %v541, 0.0
      %v551 = vld [vmem:[%s401] sm:$0xff]
      %v552 = vld [vmem:[%s401 + $0x8] sm:$0xff]
      %v553 = vld [vmem:[%s401 + $0x10] sm:$0xff]
      %v554 = vld [vmem:[%s401 + $0x18] sm:$0xff]
      %556 = vset.pattern.permute.xlu0 0
      %557 = vperm.xlu0 %556, %v551
      %v558 = vpop.permute.xlu0 %557
      %561 = vset.pattern.permute.xlu0 0
      %562 = vperm.xlu0 %561, %v552
      %v563 = vpop.permute.xlu0 %562
      %566 = vset.pattern.permute.xlu0 0
      %567 = vperm.xlu0 %566, %v553
      %v568 = vpop.permute.xlu0 %567
      %571 = vset.pattern.permute.xlu0 0
      %572 = vperm.xlu0 %571, %v554
      %v573 = vpop.permute.xlu0 %572
      %v575 = vmul.f32 %v543, %v558
      %v576 = vmul.f32 %v544, %v558
      %v577 = vmul.f32 %v545, %v563
      %v578 = vmul.f32 %v546, %v563
      %v579 = vmul.f32 %v547, %v568
      %v580 = vmul.f32 %v548, %v568
      %v581 = vmul.f32 %v549, %v573
      %v582 = vmul.f32 %v550, %v573
      %v583 = vld [vmem:[%s406] sm:$0xff]
      %v584 = vld [vmem:[%s406 + $0x8] sm:$0xff]
      %v585 = vld [vmem:[%s406 + $0x10] sm:$0xff]
      %v586 = vld [vmem:[%s406 + $0x18] sm:$0xff]
      %588 = vset.pattern.permute.xlu0 0
      %589 = vperm.xlu0 %588, %v583
      %v590 = vpop.permute.xlu0 %589
      %593 = vset.pattern.permute.xlu0 0
      %594 = vperm.xlu0 %593, %v584
      %v595 = vpop.permute.xlu0 %594
      %598 = vset.pattern.permute.xlu0 0
      %599 = vperm.xlu0 %598, %v585
      %v600 = vpop.permute.xlu0 %599
      %603 = vset.pattern.permute.xlu0 0
      %604 = vperm.xlu0 %603, %v586
      %v605 = vpop.permute.xlu0 %604
      %v607 = vadd.f32 %v575, %v590
      %v608 = vadd.f32 %v576, %v590
      %v609 = vadd.f32 %v577, %v595
      %v610 = vadd.f32 %v578, %v595
      %v611 = vadd.f32 %v579, %v600
      %v612 = vadd.f32 %v580, %v600
      %v613 = vadd.f32 %v581, %v605
      %v614 = vadd.f32 %v582, %v605
      %v615 = vmax.f32 %v607, 0.0
      %v616 = vmax.f32 %v608, 0.0
      %v617 = vmax.f32 %v609, 0.0
      %v618 = vmax.f32 %v610, 0.0
      %v619 = vmax.f32 %v611, 0.0
      %v620 = vmax.f32 %v612, 0.0
      %v621 = vmax.f32 %v613, 0.0
      %v622 = vmax.f32 %v614, 0.0
      %v623 = vld [vmem:[%s5] sm:$0x1]
      %v624 = vpack.c.bf16 %v617, %v615
      %v625 = vpack.c.bf16 %v618, %v616
      %v626 = vpack.c.bf16 %v621, %v619
      %v627 = vpack.c.bf16 %v622, %v620
      %v628 = vld [vmem:[#allocation3] sm:$0x1]
      %630 = vset.pattern.permute.xlu0 0
      %631 = vperm.xlu0 %630, %v628
      %v632 = vpop.permute.xlu0 %631
      %v634 = vlaneseq
      %v635 = vshrl.u32 %v634, 7
      %v636 = vsub.s32 0, %v635
      %v637 = vrot.slane %v632, %v636
      %vm638 = vcmask 261120
      %v640 = vsel %vm638, %v623, 0
      %642 = vmatprep.subr.bf16.mxu0 %v625
      %643 = vmatpush1.bf16.msra.mxu0 %v624
      %644 = vmatprep.subr.bf16.mxu0 %v627
      %645 = vmatpush1.bf16.msra.mxu0 %v626
      %646 = vmatprep.subr.bf16.mxu0 0
      %647 = vmatpush1.bf16.msra.mxu0 0
      %648 = vmatprep.subr.bf16.mxu0 0
      %649 = vmatpush1.bf16.msra.mxu0 0
      %650 = vmatprep.subr.bf16.mxu0 0
      %651 = vmatpush1.bf16.msra.mxu0 0
      %652 = vmatprep.subr.bf16.mxu0 0
      %653 = vmatpush1.bf16.msra.mxu0 0
      %654 = vmatprep.subr.bf16.mxu0 0
      %655 = vmatpush1.bf16.msra.mxu0 0
      %656 = vmatprep.subr.bf16.mxu0 0
      %657 = vmatpush1.bf16.msra.mxu0 0
      %658 = vmatprep.subr.bf16.mxu0 0
      %659 = vmatpush1.bf16.msra.mxu0 0
      %660 = vmatprep.subr.bf16.mxu0 0
      %661 = vmatpush1.bf16.msra.mxu0 0
      %662 = vmatprep.subr.bf16.mxu0 0
      %663 = vmatpush1.bf16.msra.mxu0 0
      %664 = vmatprep.subr.bf16.mxu0 0
      %665 = vmatpush1.bf16.msra.mxu0 0
      %666 = vmatprep.subr.bf16.mxu0 0
      %667 = vmatpush1.bf16.msra.mxu0 0
      %668 = vmatprep.subr.bf16.mxu0 0
      %669 = vmatpush1.bf16.msra.mxu0 0
      %670 = vmatprep.subr.bf16.mxu0 0
      %671 = vmatpush1.bf16.msra.mxu0 0
      %672 = vmatprep.subr.bf16.mxu0 0
      %673 = vmatpush1.bf16.msra.mxu0 0
      %674 = vmatprep.mubr.bf16.mxu0 0
      %675 = vmatmul.mubr.bf16.gmra.mrb[0].mxu0 %v640
      %v676 = vpop.f32.mrb[0].mxu0
      %v677 = vadd.f32 %v637, %v676
      %v678 = vpop.f32.mrb[0].mxu0
      %v679 = vadd.f32 %v637, %v678
      %v680 = vpop.f32.mrb[0].mxu0
      %v681 = vpop.f32.mrb[0].mxu0
      %682 = vdwg.mxu0
      %v685 = vcombine.low %v677, %v679
      %v687 = vunpack.c.l.s4 1966171168
      %v688 = vunpack.c.0.s8 %v687
      %v689 = vlaneseq
      %v690 = vshrl.u32 %v689, 7
      %v691 = vsub.s32 %v688, %v690
      %v692 = vrot.slane %v685, %v691
      %v694 = vunpack.c.l.s4 1966171168
      %v695 = vunpack.c.0.s8 %v694
      %v696 = vlaneseq
      %v697 = vshrl.u32 %v696, 7
      %v698 = vsub.s32 %v695, %v697
      %v699 = vrot.slane %v692, %v698
      %v701 = vlaneseq
      %vm702 = vcmp.ge.s32.totalorder %v701, 0
      %vm703 = vcmp.lt.s32.totalorder %v701, 256
      %vm704 = vmand %vm702, %vm703
      %705 = vst.msk [vmem:[%s415] sm:$0x3] %vm704, %v699
      %v706 = vadd.f32 %v615, %v616
      %v707 = vadd.f32 %v617, %v618
      %v708 = vadd.f32 %v619, %v620
      %v709 = vadd.f32 %v621, %v622
      %p710 = scmp.eq.s32.totalorder %s29, 0
      // Predicated region
      $region49: #{forward.2} parent=47 // pred_check
        %p711 = pneg %p710
      $region50: #{forward.2} parent=47 // pred_check_branch
        %713 = sbr.rel (%p711) target = $region52
      $region51: #{forward.2} parent=47 // pred_region
        %714 = vst [vmem:[#allocation2] sm:$0xff] %v706
        %715 = vst [vmem:[#allocation2 + $0x8] sm:$0xff] %v707
        %716 = vst [vmem:[#allocation2 + $0x10] sm:$0xff] %v708
        %717 = vst [vmem:[#allocation2 + $0x18] sm:$0xff] %v709
      $region52: #{forward.2} parent=47 // pred_fallthru
        _
      %p718 = scmp.gt.s32.totalorder %s29, 0
      // Predicated region
      $region53: #{forward.2} parent=47 // pred_check
        %p719 = pneg %p718
      $region54: #{forward.2} parent=47 // pred_check_branch
        %721 = sbr.rel (%p719) target = $region56
      $region55: #{forward.2} parent=47 // pred_region
        %v722 = vld [vmem:[#allocation2] sm:$0xff]
        %v723 = vld [vmem:[#allocation2 + $0x8] sm:$0xff]
        %v724 = vld [vmem:[#allocation2 + $0x10] sm:$0xff]
        %v725 = vld [vmem:[#allocation2 + $0x18] sm:$0xff]
        %v726 = vadd.f32 %v722, %v706
        %v727 = vadd.f32 %v723, %v707
        %v728 = vadd.f32 %v724, %v708
        %v729 = vadd.f32 %v725, %v709
        %730 = vst [vmem:[#allocation2] sm:$0xff] %v726
        %731 = vst [vmem:[#allocation2 + $0x8] sm:$0xff] %v727
        %732 = vst [vmem:[#allocation2 + $0x10] sm:$0xff] %v728
        %733 = vst [vmem:[#allocation2 + $0x18] sm:$0xff] %v729
      $region56: #{forward.2} parent=47 // pred_fallthru
        _
      // Predicated region
      $region57: #{forward.2} parent=47 // pred_check
        %p734 = pneg %p710
      $region58: #{forward.2} parent=47 // pred_check_branch
        %736 = sbr.rel (%p734) target = $region60
      $region59: #{forward.2} parent=47 // pred_region
        %v737 = vld [vmem:[#allocation2] sm:$0xff]
        %v738 = vld [vmem:[#allocation2 + $0x8] sm:$0xff]
        %v739 = vld [vmem:[#allocation2 + $0x10] sm:$0xff]
        %v740 = vld [vmem:[#allocation2 + $0x18] sm:$0xff]
        %741 = vst [vmem:[%s426] sm:$0xff] %v737
        %742 = vst [vmem:[%s426 + $0x8] sm:$0xff] %v738
        %743 = vst [vmem:[%s426 + $0x10] sm:$0xff] %v739
        %744 = vst [vmem:[%s426 + $0x18] sm:$0xff] %v740
      $region60: #{forward.2} parent=47 // pred_fallthru
        _
      %s745 = sadd.s32 %s28, %s29
      %s746 = smul.u32 2, %s745
      %p747 = scmp.lt.s32.totalorder %s27, 1
      %s748 = scalar_select %p747, %s27, 1
      %p749 = scmp.lt.s32.totalorder %s746, 1
      %s750 = scalar_select %p749, %s746, 1
      %s751 = smul.addr %s748, 2
      %s752 = sadd.s32 %s750, %s751
      %s753 = scalar_lea.vmem %s7, %s752
      %p754 = scmp.lt.s32.totalorder %s27, 1
      %s755 = scalar_select %p754, %s27, 1
      %p756 = scmp.lt.s32.totalorder %s28, 0
      %s757 = scalar_select %p756, %s28, 0
      %s758 = smul.addr %s757, 4
      %s759 = smul.addr %s755, 4
      %s760 = sadd.s32 %s758, %s759
      %s761 = smul.addr %s760, 8
      %s762 = scalar_lea.vmem %s8, %s761
      // Predicated region
      $region61: #{forward.2} parent=47 // pred_check
        %p763 = pneg %p229
      $region62: #{forward.2} parent=47 // pred_check_branch
        %765 = sbr.rel (%p763) target = $region64
      $region63: #{forward.2} parent=47 // pred_region
        %s766 = sadd.s32 %s28, %s29
        %s767 = smul.u32 2, %s766
      $region64: #{forward.2} parent=47 // pred_fallthru
        _
      // Predicated region
      $region65: #{forward.2} parent=47 // pred_check
        %p768 = pneg %p257
      $region66: #{forward.2} parent=47 // pred_check_branch
        %770 = sbr.rel (%p768) target = $region68
      $region67: #{forward.2} parent=47 // pred_region
        _
      $region68: #{forward.2} parent=47 // pred_fallthru
        _
    $region48: #{forward.2} parent=5 // pred_fallthru
      _
    %p771 = scmp.le.s32.totalorder 2, %s17
    // Predicated region
    $region69: #{forward.2} parent=5 // pred_check
      %p772 = pneg %p771
    $region70: #{forward.2} parent=5 // pred_check_branch
      %774 = sbr.rel (%p772) target = $region72
    $region71: #{forward.2} parent=5 // pred_region
      %s775 = ssub.s32 %s17, 2
      // Predicated region
      $region73: #{forward.2} parent=71 // pred_check
        %p776 = pneg %p235
      $region74: #{forward.2} parent=71 // pred_check_branch
        %778 = sbr.rel (%p776) target = $region76
      $region75: #{forward.2} parent=71 // pred_region
        %s779 = sadd.s32 %s31, %s32
        %s780 = smul.u32 2, %s779
        %p781 = scmp.lt.s32.totalorder %s30, 1
        %s782 = scalar_select %p781, %s30, 1
        %p783 = scmp.lt.s32.totalorder %s780, 1
        %s784 = scalar_select %p783, %s780, 1
        %s785 = smul.addr %s782, 2
        %s786 = sadd.s32 %s784, %s785
        %s787 = scalar_lea.vmem %s7, %s786
      $region76: #{forward.2} parent=71 // pred_fallthru
        _
      // Predicated region
      $region77: #{forward.2} parent=71 // pred_check
        %p788 = pneg %p263
      $region78: #{forward.2} parent=71 // pred_check_branch
        %790 = sbr.rel (%p788) target = $region80
      $region79: #{forward.2} parent=71 // pred_region
        %p791 = scmp.lt.s32.totalorder %s30, 1
        %s792 = scalar_select %p791, %s30, 1
        %p793 = scmp.lt.s32.totalorder %s31, 0
        %s794 = scalar_select %p793, %s31, 0
        %s795 = smul.addr %s794, 4
        %s796 = smul.addr %s792, 4
        %s797 = sadd.s32 %s795, %s796
        %s798 = smul.addr %s797, 8
        %s799 = scalar_lea.vmem %s8, %s798
      $region80: #{forward.2} parent=71 // pred_fallthru
        _
    $region72: #{forward.2} parent=5 // pred_fallthru
      _
  $region6: #{forward.2} parent=0 // loop_footer
    %s21 = sadd.s32 1, %s17
  $region7: #{forward.2} parent=0 // loop_footer_branch
    %16 = sbr.rel target = $region3
  $region8: #{forward.2} parent=0 // loop_exit
    _

</llo_original>
